<compile_context>
chip_gen: v7x
topology: tpu7x:2x2x1
jax: 0.10.0
libtpu: 0.0.40
codegen_flags: <defaults>
</compile_context>

<pallas_src>
import functools

import jax
import jax.numpy as jnp
from jax import lax
from jax.experimental import pallas as pl
from jax.experimental.pallas import tpu as pltpu


def attention_block_kernel(
    x_ref,                      # (S, bt, E) f32
    g1_ref, b1_ref,             # (1, E) f32 each          - LayerNorm1
    wq_ref, bq_ref,             # (E, E) bf16, (1, E) f32  - Q proj (1/sqrt(dh) folded in)
    wk_ref, bk_ref,             # (E, E) bf16, (1, E) f32  - K proj
    wv_ref, bv_ref,             # (E, E) bf16, (1, E) f32  - V proj
    wout_ref, bout_ref,         # (E, E) bf16, (1, E) f32  - attn out_proj
    g2_ref, b2_ref,             # (1, E) f32 each          - LayerNorm2
    w1_ref, bb1_ref,            # (E, H) bf16, (1, H) f32  - MLP linear 1
    w2_ref, bb2_ref,            # (H, E) bf16, (1, E) f32  - MLP linear 2
    o_ref,                      # (S, bt, E) f32
    attn_scr,                   # (bt*S, E) f32 VMEM scratch - assembled head outputs
    *, num_heads,
):
    S, bt, E = x_ref.shape
    dh = E // num_heads
    eps = 1e-5
    bf16 = jnp.bfloat16

    # Gather rows batch-major (b, s) so the SDPA einsums get a leading batch
    # dim; this replaces the wrapper-level HBM transpose with a cheap VMEM shuffle.
    x2 = jnp.concatenate([x_ref[:, b, :] for b in range(bt)], axis=0)   # (bt*S, E) f32

    def layernorm(v, g_ref, b_ref):
        mu = jnp.mean(v, axis=-1, keepdims=True)
        var = jnp.mean((v - mu) ** 2, axis=-1, keepdims=True)
        return (v - mu) * lax.rsqrt(var + eps) * g_ref[0] + b_ref[0]

    # ---- LayerNorm 1 + QKV projection (bf16 MXU, f32 accumulate) ----------
    ln1 = layernorm(x2, g1_ref, b1_ref).astype(bf16)
    q = jnp.dot(ln1, wq_ref[...], preferred_element_type=jnp.float32) + bq_ref[0]
    k = jnp.dot(ln1, wk_ref[...], preferred_element_type=jnp.float32) + bk_ref[0]
    v = jnp.dot(ln1, wv_ref[...], preferred_element_type=jnp.float32) + bv_ref[0]

    # ---- Scaled dot-product attention: batch-leading 3-D einsums per head --
    for h in range(num_heads):
        c0 = h * dh
        qh = q[:, c0:c0 + dh].reshape(bt, S, dh).astype(bf16)   # (bt, S, dh)
        kh = k[:, c0:c0 + dh].reshape(bt, S, dh).astype(bf16)
        vh = v[:, c0:c0 + dh].reshape(bt, S, dh).astype(bf16)

        s = jnp.einsum("bqd,bkd->bqk", qh, kh,
                       preferred_element_type=jnp.float32)      # (bt, S, S), no kh.T
        s = s - jnp.max(s, axis=-1, keepdims=True)
        p = jnp.exp(s)
        inv = pl.reciprocal(jnp.sum(p, axis=-1, keepdims=True), approx=True)  # (bt, S, 1)
        o = jnp.einsum("bqk,bkd->bqd", p.astype(bf16), vh,
                       preferred_element_type=jnp.float32)      # (bt, S, dh)
        attn_scr[:, c0:c0 + dh] = (o * inv).reshape(bt * S, dh)  # normalize the small output

    # ---- out_proj + residual 1 --------------------------------------------
    attn = attn_scr[...].astype(bf16)
    proj = jnp.dot(attn, wout_ref[...], preferred_element_type=jnp.float32) + bout_ref[0]
    x2 = x2 + proj

    # ---- LayerNorm 2 + MLP (exact erf-GELU) + residual 2 -------------------
    ln2 = layernorm(x2, g2_ref, b2_ref).astype(bf16)
    hid = jnp.dot(ln2, w1_ref[...], preferred_element_type=jnp.float32) + bb1_ref[0]
    hid = 0.5 * hid * (1.0 + lax.erf(hid * 0.7071067811865476))
    y = jnp.dot(hid.astype(bf16), w2_ref[...], preferred_element_type=jnp.float32) + bb2_ref[0]
    out = x2 + y                                                 # (bt*S, E) batch-major

    # Scatter back to the (S, bt, E) output block (seq-major HBM layout).
    for b in range(bt):
        o_ref[:, b, :] = out[b * S:(b + 1) * S, :]


def _pick_batch_tile(B, S):
    """Fuse enough batch elements per grid step to give the MXU >=128 rows,
    while keeping the block legal (bt == B or bt % 8 == 0) and bt | B.
    (On v7x, a larger B naturally yields >=2 parallel grid steps for the 2 TCs.)"""
    for d in range(1, B + 1):
        if B % d:
            continue
        if d != B and d % 8:
            continue
        if d * S >= 128:
            return d
    return B


def attention_block(x_sbe, params, num_heads, *, batch_tile=None):
    """x_sbe: (S, B, E) float32 — PyTorch nn.MultiheadAttention default layout."""
    S, B, E = x_sbe.shape
    H = params["w1"].shape[0]
    assert E % num_heads == 0
    dh = E // num_heads
    scale = 1.0 / (dh ** 0.5)

    bt = batch_tile if batch_tile is not None else _pick_batch_tile(B, S)
    assert B % bt == 0

    bf16 = jnp.bfloat16
    win, bin_ = params["win"], params["bin"]
    # Separate Q/K/V weight slabs (no (S, 3E) column slicing in the kernel),
    # scale folded into Q, all matmul weights pre-cast to bf16.
    wq = (win[:E].T * scale).astype(bf16)
    wk = win[E:2 * E].T.astype(bf16)
    wv = win[2 * E:].T.astype(bf16)
    wout = params["wout"].T.astype(bf16)
    w1 = params["w1"].T.astype(bf16)
    w2 = params["w2"].T.astype(bf16)

    row = lambda a: jnp.asarray(a, jnp.float32).reshape(1, -1)
    bq = row(bin_[:E] * scale)
    bk = row(bin_[E:2 * E])
    bv = row(bin_[2 * E:])

    const = lambda shp: pl.BlockSpec(shp, lambda i: (0, 0))

    kernel = functools.partial(attention_block_kernel, num_heads=num_heads)
    out = pl.pallas_call(
        kernel,
        out_shape=jax.ShapeDtypeStruct((S, B, E), jnp.float32),
        grid=(B // bt,),
        in_specs=[
            pl.BlockSpec((S, bt, E), lambda i: (0, i, 0)),   # x (batch tile per step)
            const((1, E)), const((1, E)),                    # LN1 gamma/beta
            const((E, E)), const((1, E)),                    # Q proj
            const((E, E)), const((1, E)),                    # K proj
            const((E, E)), const((1, E)),                    # V proj
            const((E, E)), const((1, E)),                    # out_proj
            const((1, E)), const((1, E)),                    # LN2 gamma/beta
            const((E, H)), const((1, H)),                    # MLP linear 1
            const((H, E)), const((1, E)),                    # MLP linear 2
        ],
        out_specs=pl.BlockSpec((S, bt, E), lambda i: (0, i, 0)),
        scratch_shapes=[pltpu.VMEM((bt * S, E), jnp.float32)],
        compiler_params=pltpu.CompilerParams(
            dimension_semantics=("parallel",),
            vmem_limit_bytes=48 * 1024 * 1024,   # headroom; stays below v7x's 64 MiB
        ),
    )(
        x_sbe,
        row(params["g1"]), row(params["b1"]),
        wq, bq, wk, bk, wv, bv,
        wout, row(params["bout"]),
        row(params["g2"]), row(params["b2"]),
        w1, row(params["bb1"]),
        w2, row(params["bb2"]),
    )
    return out


def init_params(key, embed_dim, hidden_dim):
    """Deterministic synthetic parameters matching the PyTorch module shapes."""
    ks = jax.random.split(key, 6)
    n = lambda k, shp: (0.02 * jax.random.normal(k, shp)).astype(jnp.float32)
    return {
        "g1": jnp.ones((embed_dim,), jnp.float32),
        "b1": jnp.zeros((embed_dim,), jnp.float32),
        "win": n(ks[0], (3 * embed_dim, embed_dim)),     # attn.in_proj_weight
        "bin": n(ks[1], (3 * embed_dim,)),               # attn.in_proj_bias
        "wout": n(ks[2], (embed_dim, embed_dim)),        # attn.out_proj.weight
        "bout": jnp.zeros((embed_dim,), jnp.float32),    # attn.out_proj.bias
        "g2": jnp.ones((embed_dim,), jnp.float32),
        "b2": jnp.zeros((embed_dim,), jnp.float32),
        "w1": n(ks[3], (hidden_dim, embed_dim)),         # linear[0].weight
        "bb1": n(ks[4], (hidden_dim,)),                  # linear[0].bias
        "w2": n(ks[5], (embed_dim, hidden_dim)),         # linear[3].weight
        "bb2": jnp.zeros((embed_dim,), jnp.float32),     # linear[3].bias
    }


def reference_forward(x_sbe, p, num_heads):
    """Pure-JAX f32 reference replicating the PyTorch semantics exactly."""
    S, B, E = x_sbe.shape
    dh = E // num_heads

    def ln(v, g, b):
        mu = v.mean(-1, keepdims=True)
        var = ((v - mu) ** 2).mean(-1, keepdims=True)
        return (v - mu) / jnp.sqrt(var + 1e-5) * g + b

    x = x_sbe
    inp = ln(x, p["g1"], p["b1"])
    qkv = inp @ p["win"].T + p["bin"]                       # (S, B, 3E)
    q, k, v = jnp.split(qkv, 3, axis=-1)
    to_heads = lambda t: t.reshape(S, B, num_heads, dh).transpose(1, 2, 0, 3)
    qh, kh, vh = map(to_heads, (q, k, v))                   # (B, H, S, dh)
    s = jnp.einsum("bhqd,bhkd->bhqk", qh, kh) / jnp.sqrt(dh)
    a = jax.nn.softmax(s, axis=-1)
    o = jnp.einsum("bhqk,bhkd->bhqd", a, vh)                # (B, H, S, dh)
    o = o.transpose(2, 0, 1, 3).reshape(S, B, E)
    x = x + (o @ p["wout"].T + p["bout"])
    l2 = ln(x, p["g2"], p["b2"])
    h = l2 @ p["w1"].T + p["bb1"]
    h = 0.5 * h * (1.0 + jax.scipy.special.erf(h / jnp.sqrt(2.0)))
    y = h @ p["w2"].T + p["bb2"]
    return x + y


if __name__ == "__main__":
    embed_dim, hidden_dim, num_heads = 32, 64, 4
    seq, batch = 8, 2

    key = jax.random.PRNGKey(0)
    kx, kp = jax.random.split(key)
    x = jax.random.normal(kx, (seq, batch, embed_dim), dtype=jnp.float32)
    params = init_params(kp, embed_dim, hidden_dim)

    out = attention_block(x, params, num_heads)
    out = jax.block_until_ready(out)

    ref = reference_forward(x, params, num_heads)
    assert out.shape == ref.shape == (seq, batch, embed_dim)
    # bf16 MXU inputs with f32 accumulation -> small deviation from the f32 reference.
    assert jnp.allclose(out, ref, atol=2e-3, rtol=2e-3), float(jnp.max(jnp.abs(out - ref)))

    print("KERNEL_OK")
</pallas_src>

<mosaic_0001>
module attributes {stable_mosaic.version = 11 : i64} {
  func.func @attention_block_kernel(%arg0: i32, %arg1: memref<8x2x32xf32, #tpu.memory_space<vmem>>, %arg2: memref<1x32xf32, #tpu.memory_space<vmem>>, %arg3: memref<1x32xf32, #tpu.memory_space<vmem>>, %arg4: memref<32x32xbf16, #tpu.memory_space<vmem>>, %arg5: memref<1x32xf32, #tpu.memory_space<vmem>>, %arg6: memref<32x32xbf16, #tpu.memory_space<vmem>>, %arg7: memref<1x32xf32, #tpu.memory_space<vmem>>, %arg8: memref<32x32xbf16, #tpu.memory_space<vmem>>, %arg9: memref<1x32xf32, #tpu.memory_space<vmem>>, %arg10: memref<32x32xbf16, #tpu.memory_space<vmem>>, %arg11: memref<1x32xf32, #tpu.memory_space<vmem>>, %arg12: memref<1x32xf32, #tpu.memory_space<vmem>>, %arg13: memref<1x32xf32, #tpu.memory_space<vmem>>, %arg14: memref<32x64xbf16, #tpu.memory_space<vmem>>, %arg15: memref<1x64xf32, #tpu.memory_space<vmem>>, %arg16: memref<64x32xbf16, #tpu.memory_space<vmem>>, %arg17: memref<1x32xf32, #tpu.memory_space<vmem>>, %arg18: memref<8x2x32xf32, #tpu.memory_space<vmem>>, %arg19: memref<16x32xf32, #tpu.memory_space<vmem>>) attributes {dimension_semantics = [#tpu.dimension_semantics<parallel>], iteration_bounds = array<i64: 1>, scalar_prefetch = 0 : i64, scratch_operands = 1 : i64, tpu.core_type = #tpu.core_type<tc>, window_params = [{transform_indices = @transform_0, window_bounds = array<i64: 8, 2, 32>}, {pipeline_mode = #tpu.pipeline_mode<synchronous>, transform_indices = @transform_1, window_bounds = array<i64: 1, 32>}, {pipeline_mode = #tpu.pipeline_mode<synchronous>, transform_indices = @transform_2, window_bounds = array<i64: 1, 32>}, {pipeline_mode = #tpu.pipeline_mode<synchronous>, transform_indices = @transform_3, window_bounds = array<i64: 32, 32>}, {pipeline_mode = #tpu.pipeline_mode<synchronous>, transform_indices = @transform_4, window_bounds = array<i64: 1, 32>}, {pipeline_mode = #tpu.pipeline_mode<synchronous>, transform_indices = @transform_5, window_bounds = array<i64: 32, 32>}, {pipeline_mode = #tpu.pipeline_mode<synchronous>, transform_indices = @transform_6, window_bounds = array<i64: 1, 32>}, {pipeline_mode = #tpu.pipeline_mode<synchronous>, transform_indices = @transform_7, window_bounds = array<i64: 32, 32>}, {pipeline_mode = #tpu.pipeline_mode<synchronous>, transform_indices = @transform_8, window_bounds = array<i64: 1, 32>}, {pipeline_mode = #tpu.pipeline_mode<synchronous>, transform_indices = @transform_9, window_bounds = array<i64: 32, 32>}, {pipeline_mode = #tpu.pipeline_mode<synchronous>, transform_indices = @transform_10, window_bounds = array<i64: 1, 32>}, {pipeline_mode = #tpu.pipeline_mode<synchronous>, transform_indices = @transform_11, window_bounds = array<i64: 1, 32>}, {pipeline_mode = #tpu.pipeline_mode<synchronous>, transform_indices = @transform_12, window_bounds = array<i64: 1, 32>}, {pipeline_mode = #tpu.pipeline_mode<synchronous>, transform_indices = @transform_13, window_bounds = array<i64: 32, 64>}, {pipeline_mode = #tpu.pipeline_mode<synchronous>, transform_indices = @transform_14, window_bounds = array<i64: 1, 64>}, {pipeline_mode = #tpu.pipeline_mode<synchronous>, transform_indices = @transform_15, window_bounds = array<i64: 64, 32>}, {pipeline_mode = #tpu.pipeline_mode<synchronous>, transform_indices = @transform_16, window_bounds = array<i64: 1, 32>}, {transform_indices = @transform_17, window_bounds = array<i64: 8, 2, 32>}]} {
    %c0 = arith.constant 0 : index
    %c0_0 = arith.constant 0 : index
    %c0_1 = arith.constant 0 : index
    %0 = vector.load %arg1[%c0, %c0_0, %c0_1] : memref<8x2x32xf32, #tpu.memory_space<vmem>>, vector<8x1x32xf32>
    %1 = vector.shape_cast %0 : vector<8x1x32xf32> to vector<8x32xf32>
    %c0_2 = arith.constant 0 : index
    %c1 = arith.constant 1 : index
    %c0_3 = arith.constant 0 : index
    %2 = vector.load %arg1[%c0_2, %c1, %c0_3] : memref<8x2x32xf32, #tpu.memory_space<vmem>>, vector<8x1x32xf32>
    %3 = vector.shape_cast %2 : vector<8x1x32xf32> to vector<8x32xf32>
    %4 = tpu.concatenate %1, %3 in 0 : vector<8x32xf32>, vector<8x32xf32> -> vector<16x32xf32>
    %cst = arith.constant dense<0.000000e+00> : vector<16xf32>
    %5 = vector.multi_reduction <add>, %4, %cst [1] : vector<16x32xf32> to vector<16xf32>
    %6 = vector.shape_cast %5 : vector<16xf32> to vector<16x1xf32>
    %cst_4 = arith.constant 3.200000e+01 : f32
    %7 = vector.broadcast %cst_4 : f32 to vector<16x1xf32>
    %8 = arith.divf %6, %7 : vector<16x1xf32>
    %9 = vector.broadcast %8 : vector<16x1xf32> to vector<16x32xf32>
    %10 = arith.subf %4, %9 : vector<16x32xf32>
    %11 = arith.mulf %10, %10 : vector<16x32xf32>
    %cst_5 = arith.constant dense<0.000000e+00> : vector<16xf32>
    %12 = vector.multi_reduction <add>, %11, %cst_5 [1] : vector<16x32xf32> to vector<16xf32>
    %13 = vector.shape_cast %12 : vector<16xf32> to vector<16x1xf32>
    %cst_6 = arith.constant 3.200000e+01 : f32
    %14 = vector.broadcast %cst_6 : f32 to vector<16x1xf32>
    %15 = arith.divf %13, %14 : vector<16x1xf32>
    %16 = vector.broadcast %8 : vector<16x1xf32> to vector<16x32xf32>
    %17 = arith.subf %4, %16 : vector<16x32xf32>
    %cst_7 = arith.constant 9.99999974E-6 : f32
    %18 = vector.broadcast %cst_7 : f32 to vector<16x1xf32>
    %19 = arith.addf %15, %18 : vector<16x1xf32>
    %20 = math.rsqrt %19 : vector<16x1xf32>
    %21 = vector.broadcast %20 : vector<16x1xf32> to vector<16x32xf32>
    %22 = arith.mulf %17, %21 : vector<16x32xf32>
    %c0_8 = arith.constant 0 : index
    %c0_9 = arith.constant 0 : index
    %23 = vector.load %arg2[%c0_8, %c0_9] : memref<1x32xf32, #tpu.memory_space<vmem>>, vector<1x32xf32>
    %24 = vector.shape_cast %23 : vector<1x32xf32> to vector<32xf32>
    %25 = vector.shape_cast %24 : vector<32xf32> to vector<1x32xf32>
    %26 = vector.broadcast %25 : vector<1x32xf32> to vector<16x32xf32>
    %27 = arith.mulf %22, %26 : vector<16x32xf32>
    %c0_10 = arith.constant 0 : index
    %c0_11 = arith.constant 0 : index
    %28 = vector.load %arg3[%c0_10, %c0_11] : memref<1x32xf32, #tpu.memory_space<vmem>>, vector<1x32xf32>
    %29 = vector.shape_cast %28 : vector<1x32xf32> to vector<32xf32>
    %30 = vector.shape_cast %29 : vector<32xf32> to vector<1x32xf32>
    %31 = vector.broadcast %30 : vector<1x32xf32> to vector<16x32xf32>
    %32 = arith.addf %27, %31 : vector<16x32xf32>
    %33 = arith.truncf %32 : vector<16x32xf32> to vector<16x32xbf16>
    %c0_12 = arith.constant 0 : index
    %c0_13 = arith.constant 0 : index
    %34 = vector.load %arg4[%c0_12, %c0_13] : memref<32x32xbf16, #tpu.memory_space<vmem>>, vector<32x32xbf16>
    %cst_14 = arith.constant dense<0.000000e+00> : vector<16x32xf32>
    %35 = tpu.matmul %33, %34, %cst_14 {dimension_numbers = #tpu.dot_dimension_numbers<[1], [0], [0], [1], [0, 0, 1, 1], [], []>} : vector<16x32xbf16>, vector<32x32xbf16>, vector<16x32xf32> -> vector<16x32xf32>
    %c0_15 = arith.constant 0 : index
    %c0_16 = arith.constant 0 : index
    %36 = vector.load %arg5[%c0_15, %c0_16] : memref<1x32xf32, #tpu.memory_space<vmem>>, vector<1x32xf32>
    %37 = vector.shape_cast %36 : vector<1x32xf32> to vector<32xf32>
    %38 = vector.shape_cast %37 : vector<32xf32> to vector<1x32xf32>
    %39 = vector.broadcast %38 : vector<1x32xf32> to vector<16x32xf32>
    %40 = arith.addf %35, %39 : vector<16x32xf32>
    %c0_17 = arith.constant 0 : index
    %c0_18 = arith.constant 0 : index
    %41 = vector.load %arg6[%c0_17, %c0_18] : memref<32x32xbf16, #tpu.memory_space<vmem>>, vector<32x32xbf16>
    %cst_19 = arith.constant dense<0.000000e+00> : vector<16x32xf32>
    %42 = tpu.matmul %33, %41, %cst_19 {dimension_numbers = #tpu.dot_dimension_numbers<[1], [0], [0], [1], [0, 0, 1, 1], [], []>} : vector<16x32xbf16>, vector<32x32xbf16>, vector<16x32xf32> -> vector<16x32xf32>
    %c0_20 = arith.constant 0 : index
    %c0_21 = arith.constant 0 : index
    %43 = vector.load %arg7[%c0_20, %c0_21] : memref<1x32xf32, #tpu.memory_space<vmem>>, vector<1x32xf32>
    %44 = vector.shape_cast %43 : vector<1x32xf32> to vector<32xf32>
    %45 = vector.shape_cast %44 : vector<32xf32> to vector<1x32xf32>
    %46 = vector.broadcast %45 : vector<1x32xf32> to vector<16x32xf32>
    %47 = arith.addf %42, %46 : vector<16x32xf32>
    %c0_22 = arith.constant 0 : index
    %c0_23 = arith.constant 0 : index
    %48 = vector.load %arg8[%c0_22, %c0_23] : memref<32x32xbf16, #tpu.memory_space<vmem>>, vector<32x32xbf16>
    %cst_24 = arith.constant dense<0.000000e+00> : vector<16x32xf32>
    %49 = tpu.matmul %33, %48, %cst_24 {dimension_numbers = #tpu.dot_dimension_numbers<[1], [0], [0], [1], [0, 0, 1, 1], [], []>} : vector<16x32xbf16>, vector<32x32xbf16>, vector<16x32xf32> -> vector<16x32xf32>
    %c0_25 = arith.constant 0 : index
    %c0_26 = arith.constant 0 : index
    %50 = vector.load %arg9[%c0_25, %c0_26] : memref<1x32xf32, #tpu.memory_space<vmem>>, vector<1x32xf32>
    %51 = vector.shape_cast %50 : vector<1x32xf32> to vector<32xf32>
    %52 = vector.shape_cast %51 : vector<32xf32> to vector<1x32xf32>
    %53 = vector.broadcast %52 : vector<1x32xf32> to vector<16x32xf32>
    %54 = arith.addf %49, %53 : vector<16x32xf32>
    %55 = vector.extract_strided_slice %40 {offsets = [0, 0], sizes = [16, 8], strides = [1, 1]} : vector<16x32xf32> to vector<16x8xf32>
    %56 = vector.shape_cast %55 : vector<16x8xf32> to vector<2x8x8xf32>
    %57 = arith.truncf %56 : vector<2x8x8xf32> to vector<2x8x8xbf16>
    %58 = vector.extract_strided_slice %47 {offsets = [0, 0], sizes = [16, 8], strides = [1, 1]} : vector<16x32xf32> to vector<16x8xf32>
    %59 = vector.shape_cast %58 : vector<16x8xf32> to vector<2x8x8xf32>
    %60 = arith.truncf %59 : vector<2x8x8xf32> to vector<2x8x8xbf16>
    %61 = vector.extract_strided_slice %54 {offsets = [0, 0], sizes = [16, 8], strides = [1, 1]} : vector<16x32xf32> to vector<16x8xf32>
    %62 = vector.shape_cast %61 : vector<16x8xf32> to vector<2x8x8xf32>
    %63 = arith.truncf %62 : vector<2x8x8xf32> to vector<2x8x8xbf16>
    "tpu.trace_start"() <{level = 10 : i32, message = "bqd,bkd->bqk"}> : () -> ()
    %cst_27 = arith.constant dense<0.000000e+00> : vector<2x8x8xf32>
    %64 = tpu.matmul %57, %60, %cst_27 {dimension_numbers = #tpu.dot_dimension_numbers<[2], [2], [1], [1], [0, 0, 0, 1, 1, 1], [0], [0]>} : vector<2x8x8xbf16>, vector<2x8x8xbf16>, vector<2x8x8xf32> -> vector<2x8x8xf32>
    "tpu.trace_stop"() : () -> ()
    %cst_28 = arith.constant dense<0xFF800000> : vector<2x8xf32>
    %65 = vector.multi_reduction <maximumf>, %64, %cst_28 [2] : vector<2x8x8xf32> to vector<2x8xf32>
    %66 = vector.shape_cast %65 : vector<2x8xf32> to vector<2x8x1xf32>
    %67 = vector.broadcast %66 : vector<2x8x1xf32> to vector<2x8x8xf32>
    %68 = arith.subf %64, %67 : vector<2x8x8xf32>
    %69 = math.exp %68 : vector<2x8x8xf32>
    %cst_29 = arith.constant dense<0.000000e+00> : vector<2x8xf32>
    %70 = vector.multi_reduction <add>, %69, %cst_29 [2] : vector<2x8x8xf32> to vector<2x8xf32>
    %71 = vector.shape_cast %70 : vector<2x8xf32> to vector<2x8x1xf32>
    %72 = tpu.reciprocal %71 {approx = true} : vector<2x8x1xf32> -> vector<2x8x1xf32>
    %73 = arith.truncf %69 : vector<2x8x8xf32> to vector<2x8x8xbf16>
    "tpu.trace_start"() <{level = 10 : i32, message = "bqk,bkd->bqd"}> : () -> ()
    %cst_30 = arith.constant dense<0.000000e+00> : vector<2x8x8xf32>
    %74 = tpu.matmul %73, %63, %cst_30 {dimension_numbers = #tpu.dot_dimension_numbers<[2], [1], [1], [2], [0, 0, 0, 1, 1, 2], [0], [0]>} : vector<2x8x8xbf16>, vector<2x8x8xbf16>, vector<2x8x8xf32> -> vector<2x8x8xf32>
    "tpu.trace_stop"() : () -> ()
    %75 = vector.broadcast %72 : vector<2x8x1xf32> to vector<2x8x8xf32>
    %76 = arith.mulf %74, %75 : vector<2x8x8xf32>
    %77 = vector.shape_cast %76 : vector<2x8x8xf32> to vector<16x8xf32>
    %c0_31 = arith.constant 0 : index
    %c0_32 = arith.constant 0 : index
    %78 = vector.load %arg19[%c0_31, %c0_32] : memref<16x32xf32, #tpu.memory_space<vmem>>, vector<16x8xf32>
    tpu.vector_store %arg19[%c0_31, %c0_32], %77 {strides = array<i32>} : memref<16x32xf32, #tpu.memory_space<vmem>>, vector<16x8xf32>,
    %79 = vector.extract_strided_slice %40 {offsets = [0, 8], sizes = [16, 8], strides = [1, 1]} : vector<16x32xf32> to vector<16x8xf32>
    %80 = vector.shape_cast %79 : vector<16x8xf32> to vector<2x8x8xf32>
    %81 = arith.truncf %80 : vector<2x8x8xf32> to vector<2x8x8xbf16>
    %82 = vector.extract_strided_slice %47 {offsets = [0, 8], sizes = [16, 8], strides = [1, 1]} : vector<16x32xf32> to vector<16x8xf32>
    %83 = vector.shape_cast %82 : vector<16x8xf32> to vector<2x8x8xf32>
    %84 = arith.truncf %83 : vector<2x8x8xf32> to vector<2x8x8xbf16>
    %85 = vector.extract_strided_slice %54 {offsets = [0, 8], sizes = [16, 8], strides = [1, 1]} : vector<16x32xf32> to vector<16x8xf32>
    %86 = vector.shape_cast %85 : vector<16x8xf32> to vector<2x8x8xf32>
    %87 = arith.truncf %86 : vector<2x8x8xf32> to vector<2x8x8xbf16>
    "tpu.trace_start"() <{level = 10 : i32, message = "bqd,bkd->bqk"}> : () -> ()
    %cst_33 = arith.constant dense<0.000000e+00> : vector<2x8x8xf32>
    %88 = tpu.matmul %81, %84, %cst_33 {dimension_numbers = #tpu.dot_dimension_numbers<[2], [2], [1], [1], [0, 0, 0, 1, 1, 1], [0], [0]>} : vector<2x8x8xbf16>, vector<2x8x8xbf16>, vector<2x8x8xf32> -> vector<2x8x8xf32>
    "tpu.trace_stop"() : () -> ()
    %cst_34 = arith.constant dense<0xFF800000> : vector<2x8xf32>
    %89 = vector.multi_reduction <maximumf>, %88, %cst_34 [2] : vector<2x8x8xf32> to vector<2x8xf32>
    %90 = vector.shape_cast %89 : vector<2x8xf32> to vector<2x8x1xf32>
    %91 = vector.broadcast %90 : vector<2x8x1xf32> to vector<2x8x8xf32>
    %92 = arith.subf %88, %91 : vector<2x8x8xf32>
    %93 = math.exp %92 : vector<2x8x8xf32>
    %cst_35 = arith.constant dense<0.000000e+00> : vector<2x8xf32>
    %94 = vector.multi_reduction <add>, %93, %cst_35 [2] : vector<2x8x8xf32> to vector<2x8xf32>
    %95 = vector.shape_cast %94 : vector<2x8xf32> to vector<2x8x1xf32>
    %96 = tpu.reciprocal %95 {approx = true} : vector<2x8x1xf32> -> vector<2x8x1xf32>
    %97 = arith.truncf %93 : vector<2x8x8xf32> to vector<2x8x8xbf16>
    "tpu.trace_start"() <{level = 10 : i32, message = "bqk,bkd->bqd"}> : () -> ()
    %cst_36 = arith.constant dense<0.000000e+00> : vector<2x8x8xf32>
    %98 = tpu.matmul %97, %87, %cst_36 {dimension_numbers = #tpu.dot_dimension_numbers<[2], [1], [1], [2], [0, 0, 0, 1, 1, 2], [0], [0]>} : vector<2x8x8xbf16>, vector<2x8x8xbf16>, vector<2x8x8xf32> -> vector<2x8x8xf32>
    "tpu.trace_stop"() : () -> ()
    %99 = vector.broadcast %96 : vector<2x8x1xf32> to vector<2x8x8xf32>
    %100 = arith.mulf %98, %99 : vector<2x8x8xf32>
    %101 = vector.shape_cast %100 : vector<2x8x8xf32> to vector<16x8xf32>
    %c0_37 = arith.constant 0 : index
    %c8 = arith.constant 8 : index
    %102 = vector.load %arg19[%c0_37, %c8] : memref<16x32xf32, #tpu.memory_space<vmem>>, vector<16x8xf32>
    tpu.vector_store %arg19[%c0_37, %c8], %101 {strides = array<i32>} : memref<16x32xf32, #tpu.memory_space<vmem>>, vector<16x8xf32>,
    %103 = vector.extract_strided_slice %40 {offsets = [0, 16], sizes = [16, 8], strides = [1, 1]} : vector<16x32xf32> to vector<16x8xf32>
    %104 = vector.shape_cast %103 : vector<16x8xf32> to vector<2x8x8xf32>
    %105 = arith.truncf %104 : vector<2x8x8xf32> to vector<2x8x8xbf16>
    %106 = vector.extract_strided_slice %47 {offsets = [0, 16], sizes = [16, 8], strides = [1, 1]} : vector<16x32xf32> to vector<16x8xf32>
    %107 = vector.shape_cast %106 : vector<16x8xf32> to vector<2x8x8xf32>
    %108 = arith.truncf %107 : vector<2x8x8xf32> to vector<2x8x8xbf16>
    %109 = vector.extract_strided_slice %54 {offsets = [0, 16], sizes = [16, 8], strides = [1, 1]} : vector<16x32xf32> to vector<16x8xf32>
    %110 = vector.shape_cast %109 : vector<16x8xf32> to vector<2x8x8xf32>
    %111 = arith.truncf %110 : vector<2x8x8xf32> to vector<2x8x8xbf16>
    "tpu.trace_start"() <{level = 10 : i32, message = "bqd,bkd->bqk"}> : () -> ()
    %cst_38 = arith.constant dense<0.000000e+00> : vector<2x8x8xf32>
    %112 = tpu.matmul %105, %108, %cst_38 {dimension_numbers = #tpu.dot_dimension_numbers<[2], [2], [1], [1], [0, 0, 0, 1, 1, 1], [0], [0]>} : vector<2x8x8xbf16>, vector<2x8x8xbf16>, vector<2x8x8xf32> -> vector<2x8x8xf32>
    "tpu.trace_stop"() : () -> ()
    %cst_39 = arith.constant dense<0xFF800000> : vector<2x8xf32>
    %113 = vector.multi_reduction <maximumf>, %112, %cst_39 [2] : vector<2x8x8xf32> to vector<2x8xf32>
    %114 = vector.shape_cast %113 : vector<2x8xf32> to vector<2x8x1xf32>
    %115 = vector.broadcast %114 : vector<2x8x1xf32> to vector<2x8x8xf32>
    %116 = arith.subf %112, %115 : vector<2x8x8xf32>
    %117 = math.exp %116 : vector<2x8x8xf32>
    %cst_40 = arith.constant dense<0.000000e+00> : vector<2x8xf32>
    %118 = vector.multi_reduction <add>, %117, %cst_40 [2] : vector<2x8x8xf32> to vector<2x8xf32>
    %119 = vector.shape_cast %118 : vector<2x8xf32> to vector<2x8x1xf32>
    %120 = tpu.reciprocal %119 {approx = true} : vector<2x8x1xf32> -> vector<2x8x1xf32>
    %121 = arith.truncf %117 : vector<2x8x8xf32> to vector<2x8x8xbf16>
    "tpu.trace_start"() <{level = 10 : i32, message = "bqk,bkd->bqd"}> : () -> ()
    %cst_41 = arith.constant dense<0.000000e+00> : vector<2x8x8xf32>
    %122 = tpu.matmul %121, %111, %cst_41 {dimension_numbers = #tpu.dot_dimension_numbers<[2], [1], [1], [2], [0, 0, 0, 1, 1, 2], [0], [0]>} : vector<2x8x8xbf16>, vector<2x8x8xbf16>, vector<2x8x8xf32> -> vector<2x8x8xf32>
    "tpu.trace_stop"() : () -> ()
    %123 = vector.broadcast %120 : vector<2x8x1xf32> to vector<2x8x8xf32>
    %124 = arith.mulf %122, %123 : vector<2x8x8xf32>
    %125 = vector.shape_cast %124 : vector<2x8x8xf32> to vector<16x8xf32>
    %c0_42 = arith.constant 0 : index
    %c16 = arith.constant 16 : index
    %126 = vector.load %arg19[%c0_42, %c16] : memref<16x32xf32, #tpu.memory_space<vmem>>, vector<16x8xf32>
    tpu.vector_store %arg19[%c0_42, %c16], %125 {strides = array<i32>} : memref<16x32xf32, #tpu.memory_space<vmem>>, vector<16x8xf32>,
    %127 = vector.extract_strided_slice %40 {offsets = [0, 24], sizes = [16, 8], strides = [1, 1]} : vector<16x32xf32> to vector<16x8xf32>
    %128 = vector.shape_cast %127 : vector<16x8xf32> to vector<2x8x8xf32>
    %129 = arith.truncf %128 : vector<2x8x8xf32> to vector<2x8x8xbf16>
    %130 = vector.extract_strided_slice %47 {offsets = [0, 24], sizes = [16, 8], strides = [1, 1]} : vector<16x32xf32> to vector<16x8xf32>
    %131 = vector.shape_cast %130 : vector<16x8xf32> to vector<2x8x8xf32>
    %132 = arith.truncf %131 : vector<2x8x8xf32> to vector<2x8x8xbf16>
    %133 = vector.extract_strided_slice %54 {offsets = [0, 24], sizes = [16, 8], strides = [1, 1]} : vector<16x32xf32> to vector<16x8xf32>
    %134 = vector.shape_cast %133 : vector<16x8xf32> to vector<2x8x8xf32>
    %135 = arith.truncf %134 : vector<2x8x8xf32> to vector<2x8x8xbf16>
    "tpu.trace_start"() <{level = 10 : i32, message = "bqd,bkd->bqk"}> : () -> ()
    %cst_43 = arith.constant dense<0.000000e+00> : vector<2x8x8xf32>
    %136 = tpu.matmul %129, %132, %cst_43 {dimension_numbers = #tpu.dot_dimension_numbers<[2], [2], [1], [1], [0, 0, 0, 1, 1, 1], [0], [0]>} : vector<2x8x8xbf16>, vector<2x8x8xbf16>, vector<2x8x8xf32> -> vector<2x8x8xf32>
    "tpu.trace_stop"() : () -> ()
    %cst_44 = arith.constant dense<0xFF800000> : vector<2x8xf32>
    %137 = vector.multi_reduction <maximumf>, %136, %cst_44 [2] : vector<2x8x8xf32> to vector<2x8xf32>
    %138 = vector.shape_cast %137 : vector<2x8xf32> to vector<2x8x1xf32>
    %139 = vector.broadcast %138 : vector<2x8x1xf32> to vector<2x8x8xf32>
    %140 = arith.subf %136, %139 : vector<2x8x8xf32>
    %141 = math.exp %140 : vector<2x8x8xf32>
    %cst_45 = arith.constant dense<0.000000e+00> : vector<2x8xf32>
    %142 = vector.multi_reduction <add>, %141, %cst_45 [2] : vector<2x8x8xf32> to vector<2x8xf32>
    %143 = vector.shape_cast %142 : vector<2x8xf32> to vector<2x8x1xf32>
    %144 = tpu.reciprocal %143 {approx = true} : vector<2x8x1xf32> -> vector<2x8x1xf32>
    %145 = arith.truncf %141 : vector<2x8x8xf32> to vector<2x8x8xbf16>
    "tpu.trace_start"() <{level = 10 : i32, message = "bqk,bkd->bqd"}> : () -> ()
    %cst_46 = arith.constant dense<0.000000e+00> : vector<2x8x8xf32>
    %146 = tpu.matmul %145, %135, %cst_46 {dimension_numbers = #tpu.dot_dimension_numbers<[2], [1], [1], [2], [0, 0, 0, 1, 1, 2], [0], [0]>} : vector<2x8x8xbf16>, vector<2x8x8xbf16>, vector<2x8x8xf32> -> vector<2x8x8xf32>
    "tpu.trace_stop"() : () -> ()
    %147 = vector.broadcast %144 : vector<2x8x1xf32> to vector<2x8x8xf32>
    %148 = arith.mulf %146, %147 : vector<2x8x8xf32>
    %149 = vector.shape_cast %148 : vector<2x8x8xf32> to vector<16x8xf32>
    %c0_47 = arith.constant 0 : index
    %c24 = arith.constant 24 : index
    %150 = vector.load %arg19[%c0_47, %c24] : memref<16x32xf32, #tpu.memory_space<vmem>>, vector<16x8xf32>
    tpu.vector_store %arg19[%c0_47, %c24], %149 {strides = array<i32>} : memref<16x32xf32, #tpu.memory_space<vmem>>, vector<16x8xf32>,
    %c0_48 = arith.constant 0 : index
    %c0_49 = arith.constant 0 : index
    %151 = vector.load %arg19[%c0_48, %c0_49] : memref<16x32xf32, #tpu.memory_space<vmem>>, vector<16x32xf32>
    %152 = arith.truncf %151 : vector<16x32xf32> to vector<16x32xbf16>
    %c0_50 = arith.constant 0 : index
    %c0_51 = arith.constant 0 : index
    %153 = vector.load %arg10[%c0_50, %c0_51] : memref<32x32xbf16, #tpu.memory_space<vmem>>, vector<32x32xbf16>
    %cst_52 = arith.constant dense<0.000000e+00> : vector<16x32xf32>
    %154 = tpu.matmul %152, %153, %cst_52 {dimension_numbers = #tpu.dot_dimension_numbers<[1], [0], [0], [1], [0, 0, 1, 1], [], []>} : vector<16x32xbf16>, vector<32x32xbf16>, vector<16x32xf32> -> vector<16x32xf32>
    %c0_53 = arith.constant 0 : index
    %c0_54 = arith.constant 0 : index
    %155 = vector.load %arg11[%c0_53, %c0_54] : memref<1x32xf32, #tpu.memory_space<vmem>>, vector<1x32xf32>
    %156 = vector.shape_cast %155 : vector<1x32xf32> to vector<32xf32>
    %157 = vector.shape_cast %156 : vector<32xf32> to vector<1x32xf32>
    %158 = vector.broadcast %157 : vector<1x32xf32> to vector<16x32xf32>
    %159 = arith.addf %154, %158 : vector<16x32xf32>
    %160 = arith.addf %4, %159 : vector<16x32xf32>
    %cst_55 = arith.constant dense<0.000000e+00> : vector<16xf32>
    %161 = vector.multi_reduction <add>, %160, %cst_55 [1] : vector<16x32xf32> to vector<16xf32>
    %162 = vector.shape_cast %161 : vector<16xf32> to vector<16x1xf32>
    %cst_56 = arith.constant 3.200000e+01 : f32
    %163 = vector.broadcast %cst_56 : f32 to vector<16x1xf32>
    %164 = arith.divf %162, %163 : vector<16x1xf32>
    %165 = vector.broadcast %164 : vector<16x1xf32> to vector<16x32xf32>
    %166 = arith.subf %160, %165 : vector<16x32xf32>
    %167 = arith.mulf %166, %166 : vector<16x32xf32>
    %cst_57 = arith.constant dense<0.000000e+00> : vector<16xf32>
    %168 = vector.multi_reduction <add>, %167, %cst_57 [1] : vector<16x32xf32> to vector<16xf32>
    %169 = vector.shape_cast %168 : vector<16xf32> to vector<16x1xf32>
    %cst_58 = arith.constant 3.200000e+01 : f32
    %170 = vector.broadcast %cst_58 : f32 to vector<16x1xf32>
    %171 = arith.divf %169, %170 : vector<16x1xf32>
    %172 = vector.broadcast %164 : vector<16x1xf32> to vector<16x32xf32>
    %173 = arith.subf %160, %172 : vector<16x32xf32>
    %cst_59 = arith.constant 9.99999974E-6 : f32
    %174 = vector.broadcast %cst_59 : f32 to vector<16x1xf32>
    %175 = arith.addf %171, %174 : vector<16x1xf32>
    %176 = math.rsqrt %175 : vector<16x1xf32>
    %177 = vector.broadcast %176 : vector<16x1xf32> to vector<16x32xf32>
    %178 = arith.mulf %173, %177 : vector<16x32xf32>
    %c0_60 = arith.constant 0 : index
    %c0_61 = arith.constant 0 : index
    %179 = vector.load %arg12[%c0_60, %c0_61] : memref<1x32xf32, #tpu.memory_space<vmem>>, vector<1x32xf32>
    %180 = vector.shape_cast %179 : vector<1x32xf32> to vector<32xf32>
    %181 = vector.shape_cast %180 : vector<32xf32> to vector<1x32xf32>
    %182 = vector.broadcast %181 : vector<1x32xf32> to vector<16x32xf32>
    %183 = arith.mulf %178, %182 : vector<16x32xf32>
    %c0_62 = arith.constant 0 : index
    %c0_63 = arith.constant 0 : index
    %184 = vector.load %arg13[%c0_62, %c0_63] : memref<1x32xf32, #tpu.memory_space<vmem>>, vector<1x32xf32>
    %185 = vector.shape_cast %184 : vector<1x32xf32> to vector<32xf32>
    %186 = vector.shape_cast %185 : vector<32xf32> to vector<1x32xf32>
    %187 = vector.broadcast %186 : vector<1x32xf32> to vector<16x32xf32>
    %188 = arith.addf %183, %187 : vector<16x32xf32>
    %189 = arith.truncf %188 : vector<16x32xf32> to vector<16x32xbf16>
    %c0_64 = arith.constant 0 : index
    %c0_65 = arith.constant 0 : index
    %190 = vector.load %arg14[%c0_64, %c0_65] : memref<32x64xbf16, #tpu.memory_space<vmem>>, vector<32x64xbf16>
    %cst_66 = arith.constant dense<0.000000e+00> : vector<16x64xf32>
    %191 = tpu.matmul %189, %190, %cst_66 {dimension_numbers = #tpu.dot_dimension_numbers<[1], [0], [0], [1], [0, 0, 1, 1], [], []>} : vector<16x32xbf16>, vector<32x64xbf16>, vector<16x64xf32> -> vector<16x64xf32>
    %c0_67 = arith.constant 0 : index
    %c0_68 = arith.constant 0 : index
    %192 = vector.load %arg15[%c0_67, %c0_68] : memref<1x64xf32, #tpu.memory_space<vmem>>, vector<1x64xf32>
    %193 = vector.shape_cast %192 : vector<1x64xf32> to vector<64xf32>
    %194 = vector.shape_cast %193 : vector<64xf32> to vector<1x64xf32>
    %195 = vector.broadcast %194 : vector<1x64xf32> to vector<16x64xf32>
    %196 = arith.addf %191, %195 : vector<16x64xf32>
    %cst_69 = arith.constant 5.000000e-01 : f32
    %197 = vector.broadcast %cst_69 : f32 to vector<16x64xf32>
    %198 = arith.mulf %197, %196 : vector<16x64xf32>
    %cst_70 = arith.constant 0.707106769 : f32
    %199 = vector.broadcast %cst_70 : f32 to vector<16x64xf32>
    %200 = arith.mulf %196, %199 : vector<16x64xf32>
    %201 = math.erf %200 : vector<16x64xf32>
    %cst_71 = arith.constant 1.000000e+00 : f32
    %202 = vector.broadcast %cst_71 : f32 to vector<16x64xf32>
    %203 = arith.addf %202, %201 : vector<16x64xf32>
    %204 = arith.mulf %198, %203 : vector<16x64xf32>
    %205 = arith.truncf %204 : vector<16x64xf32> to vector<16x64xbf16>
    %c0_72 = arith.constant 0 : index
    %c0_73 = arith.constant 0 : index
    %206 = vector.load %arg16[%c0_72, %c0_73] : memref<64x32xbf16, #tpu.memory_space<vmem>>, vector<64x32xbf16>
    %cst_74 = arith.constant dense<0.000000e+00> : vector<16x32xf32>
    %207 = tpu.matmul %205, %206, %cst_74 {dimension_numbers = #tpu.dot_dimension_numbers<[1], [0], [0], [1], [0, 0, 1, 1], [], []>} : vector<16x64xbf16>, vector<64x32xbf16>, vector<16x32xf32> -> vector<16x32xf32>
    %c0_75 = arith.constant 0 : index
    %c0_76 = arith.constant 0 : index
    %208 = vector.load %arg17[%c0_75, %c0_76] : memref<1x32xf32, #tpu.memory_space<vmem>>, vector<1x32xf32>
    %209 = vector.shape_cast %208 : vector<1x32xf32> to vector<32xf32>
    %210 = vector.shape_cast %209 : vector<32xf32> to vector<1x32xf32>
    %211 = vector.broadcast %210 : vector<1x32xf32> to vector<16x32xf32>
    %212 = arith.addf %207, %211 : vector<16x32xf32>
    %213 = arith.addf %160, %212 : vector<16x32xf32>
    %214 = vector.extract_strided_slice %213 {offsets = [0, 0], sizes = [8, 32], strides = [1, 1]} : vector<16x32xf32> to vector<8x32xf32>
    %c0_77 = arith.constant 0 : index
    %c0_78 = arith.constant 0 : index
    %c0_79 = arith.constant 0 : index
    %215 = vector.load %arg18[%c0_77, %c0_78, %c0_79] : memref<8x2x32xf32, #tpu.memory_space<vmem>>, vector<8x1x32xf32>
    %216 = vector.shape_cast %215 : vector<8x1x32xf32> to vector<8x32xf32>
    %217 = vector.shape_cast %214 : vector<8x32xf32> to vector<8x1x32xf32>
    tpu.vector_store %arg18[%c0_77, %c0_78, %c0_79], %217 {strides = array<i32>} : memref<8x2x32xf32, #tpu.memory_space<vmem>>, vector<8x1x32xf32>,
    %218 = vector.extract_strided_slice %213 {offsets = [8, 0], sizes = [8, 32], strides = [1, 1]} : vector<16x32xf32> to vector<8x32xf32>
    %c0_80 = arith.constant 0 : index
    %c1_81 = arith.constant 1 : index
    %c0_82 = arith.constant 0 : index
    %219 = vector.load %arg18[%c0_80, %c1_81, %c0_82] : memref<8x2x32xf32, #tpu.memory_space<vmem>>, vector<8x1x32xf32>
    %220 = vector.shape_cast %219 : vector<8x1x32xf32> to vector<8x32xf32>
    %221 = vector.shape_cast %218 : vector<8x32xf32> to vector<8x1x32xf32>
    tpu.vector_store %arg18[%c0_80, %c1_81, %c0_82], %221 {strides = array<i32>} : memref<8x2x32xf32, #tpu.memory_space<vmem>>, vector<8x1x32xf32>,
    return
  }
  func.func @transform_0(%arg0: i32) -> (i32, i32, i32) {
    %c0_i32 = arith.constant 0 : i32
    %c0_i32_0 = arith.constant 0 : i32
    %c0_i32_1 = arith.constant 0 : i32
    return %c0_i32, %arg0, %c0_i32_0 : i32, i32, i32
  }
  func.func @transform_1(%arg0: i32) -> (i32, i32) {
    %c0_i32 = arith.constant 0 : i32
    %c0_i32_0 = arith.constant 0 : i32
    %c0_i32_1 = arith.constant 0 : i32
    return %c0_i32, %c0_i32_0 : i32, i32
  }
  func.func @transform_2(%arg0: i32) -> (i32, i32) {
    %c0_i32 = arith.constant 0 : i32
    %c0_i32_0 = arith.constant 0 : i32
    %c0_i32_1 = arith.constant 0 : i32
    return %c0_i32, %c0_i32_0 : i32, i32
  }
  func.func @transform_3(%arg0: i32) -> (i32, i32) {
    %c0_i32 = arith.constant 0 : i32
    %c0_i32_0 = arith.constant 0 : i32
    %c0_i32_1 = arith.constant 0 : i32
    return %c0_i32, %c0_i32_0 : i32, i32
  }
  func.func @transform_4(%arg0: i32) -> (i32, i32) {
    %c0_i32 = arith.constant 0 : i32
    %c0_i32_0 = arith.constant 0 : i32
    %c0_i32_1 = arith.constant 0 : i32
    return %c0_i32, %c0_i32_0 : i32, i32
  }
  func.func @transform_5(%arg0: i32) -> (i32, i32) {
    %c0_i32 = arith.constant 0 : i32
    %c0_i32_0 = arith.constant 0 : i32
    %c0_i32_1 = arith.constant 0 : i32
    return %c0_i32, %c0_i32_0 : i32, i32
  }
  func.func @transform_6(%arg0: i32) -> (i32, i32) {
    %c0_i32 = arith.constant 0 : i32
    %c0_i32_0 = arith.constant 0 : i32
    %c0_i32_1 = arith.constant 0 : i32
    return %c0_i32, %c0_i32_0 : i32, i32
  }
  func.func @transform_7(%arg0: i32) -> (i32, i32) {
    %c0_i32 = arith.constant 0 : i32
    %c0_i32_0 = arith.constant 0 : i32
    %c0_i32_1 = arith.constant 0 : i32
    return %c0_i32, %c0_i32_0 : i32, i32
  }
  func.func @transform_8(%arg0: i32) -> (i32, i32) {
    %c0_i32 = arith.constant 0 : i32
    %c0_i32_0 = arith.constant 0 : i32
    %c0_i32_1 = arith.constant 0 : i32
    return %c0_i32, %c0_i32_0 : i32, i32
  }
  func.func @transform_9(%arg0: i32) -> (i32, i32) {
    %c0_i32 = arith.constant 0 : i32
    %c0_i32_0 = arith.constant 0 : i32
    %c0_i32_1 = arith.constant 0 : i32
    return %c0_i32, %c0_i32_0 : i32, i32
  }
  func.func @transform_10(%arg0: i32) -> (i32, i32) {
    %c0_i32 = arith.constant 0 : i32
    %c0_i32_0 = arith.constant 0 : i32
    %c0_i32_1 = arith.constant 0 : i32
    return %c0_i32, %c0_i32_0 : i32, i32
  }
  func.func @transform_11(%arg0: i32) -> (i32, i32) {
    %c0_i32 = arith.constant 0 : i32
    %c0_i32_0 = arith.constant 0 : i32
    %c0_i32_1 = arith.constant 0 : i32
    return %c0_i32, %c0_i32_0 : i32, i32
  }
  func.func @transform_12(%arg0: i32) -> (i32, i32) {
    %c0_i32 = arith.constant 0 : i32
    %c0_i32_0 = arith.constant 0 : i32
    %c0_i32_1 = arith.constant 0 : i32
    return %c0_i32, %c0_i32_0 : i32, i32
  }
  func.func @transform_13(%arg0: i32) -> (i32, i32) {
    %c0_i32 = arith.constant 0 : i32
    %c0_i32_0 = arith.constant 0 : i32
    %c0_i32_1 = arith.constant 0 : i32
    return %c0_i32, %c0_i32_0 : i32, i32
  }
  func.func @transform_14(%arg0: i32) -> (i32, i32) {
    %c0_i32 = arith.constant 0 : i32
    %c0_i32_0 = arith.constant 0 : i32
    %c0_i32_1 = arith.constant 0 : i32
    return %c0_i32, %c0_i32_0 : i32, i32
  }
  func.func @transform_15(%arg0: i32) -> (i32, i32) {
    %c0_i32 = arith.constant 0 : i32
    %c0_i32_0 = arith.constant 0 : i32
    %c0_i32_1 = arith.constant 0 : i32
    return %c0_i32, %c0_i32_0 : i32, i32
  }
  func.func @transform_16(%arg0: i32) -> (i32, i32) {
    %c0_i32 = arith.constant 0 : i32
    %c0_i32_0 = arith.constant 0 : i32
    %c0_i32_1 = arith.constant 0 : i32
    return %c0_i32, %c0_i32_0 : i32, i32
  }
  func.func @transform_17(%arg0: i32) -> (i32, i32, i32) {
    %c0_i32 = arith.constant 0 : i32
    %c0_i32_0 = arith.constant 0 : i32
    %c0_i32_1 = arith.constant 0 : i32
    return %c0_i32, %arg0, %c0_i32_0 : i32, i32, i32
  }
}

</mosaic_0001>

<llo_original>
// kernel: tpu_custom_call.1
$region0: #{tpu_custom_call.1}
  #allocation0 [shape = 'u32[]', space=smem, size = 0x4, offset = 0x4, fixed_abs, tag = 'smem constant byte address 0x4 - core index']
  #allocation1 [shape = 'u32[144,128]{1,0:T(1,128)}', space=vmem, size = 0x12000, scoped, tag = 'internal scratch']
  #allocation2 [shape = 'f32[16,32]{1,0:T(8,128)}', space=vmem, size = 0x2000, scoped, tag = 'scratch operand']
  %s0 = inlined_call_operand.vmem [shape: f32[8,2,32], index: 0, kind: input, shape index: {}]
  %s1 = inlined_call_operand.vmem [shape: f32[1,32], index: 1, kind: input, shape index: {}]
  %s2 = inlined_call_operand.hbm [shape: f32[1,32], index: 2, kind: input, shape index: {}]
  %s3 = inlined_call_operand.vmem [shape: bf16[32,32], index: 3, kind: input, shape index: {}]
  %s4 = inlined_call_operand.hbm [shape: f32[1,32], index: 4, kind: input, shape index: {}]
  %s5 = inlined_call_operand.vmem [shape: bf16[32,32], index: 5, kind: input, shape index: {}]
  %s6 = inlined_call_operand.hbm [shape: f32[1,32], index: 6, kind: input, shape index: {}]
  %s7 = inlined_call_operand.hbm [shape: bf16[32,32], index: 7, kind: input, shape index: {}]
  %s8 = inlined_call_operand.hbm [shape: f32[1,32], index: 8, kind: input, shape index: {}]
  %s9 = inlined_call_operand.vmem [shape: bf16[32,32], index: 9, kind: input, shape index: {}]
  %s10 = inlined_call_operand.hbm [shape: f32[1,32], index: 10, kind: input, shape index: {}]
  %s11 = inlined_call_operand.hbm [shape: f32[1,32], index: 11, kind: input, shape index: {}]
  %s12 = inlined_call_operand.hbm [shape: f32[1,32], index: 12, kind: input, shape index: {}]
  %s13 = inlined_call_operand.vmem [shape: bf16[32,64], index: 13, kind: input, shape index: {}]
  %s14 = inlined_call_operand.vmem [shape: f32[1,64], index: 14, kind: input, shape index: {}]
  %s15 = inlined_call_operand.vmem [shape: bf16[64,32], index: 15, kind: input, shape index: {}]
  %s16 = inlined_call_operand.vmem [shape: f32[1,32], index: 16, kind: input, shape index: {}]
  %s17 = inlined_call_operand.hbm [shape: f32[8,2,32], index: 17, kind: output, shape index: {}]
  %s18 = sld [smem:[#allocation0]]
  $region110: #{tpu_custom_call.1} parent=0
    _
  %s20 = ssub.s32 1, %s18
  %s21 = scalar_select 0, %s20, %s18
  $region1: #{tpu_custom_call.1} parent=0
    #allocation3 [shape = 'u8[512]{0}', space=vmem, size = 0x400, scoped, tag = 'input window, operand 2, single buffered']
    #allocation4 [shape = 's32[1]{0}', space=sflag, size = 0x4, scoped, tag = 'scoped memory for tpu_custom_call.1']
    #allocation5 [shape = 's32[1]{0}', space=sflag, size = 0x4, scoped, tag = 'scoped memory for tpu_custom_call.1']
    #allocation6 [shape = 'u8[512]{0}', space=vmem, size = 0x400, scoped, tag = 'input window, operand 4, single buffered']
    #allocation7 [shape = 's32[1]{0}', space=sflag, size = 0x4, scoped, tag = 'scoped memory for tpu_custom_call.1']
    #allocation8 [shape = 'u8[512]{0}', space=vmem, size = 0x400, scoped, tag = 'input window, operand 6, single buffered']
    #allocation9 [shape = 'u8[8192]{0}', space=vmem, size = 0x2000, scoped, tag = 'input window, operand 7, single buffered']
    #allocation10 [shape = 's32[1]{0}', space=sflag, size = 0x4, scoped, tag = 'scoped memory for tpu_custom_call.1']
    #allocation11 [shape = 'u8[512]{0}', space=vmem, size = 0x400, scoped, tag = 'input window, operand 8, single buffered']
    #allocation12 [shape = 'u8[512]{0}', space=vmem, size = 0x400, scoped, tag = 'input window, operand 10, single buffered']
    #allocation13 [shape = 's32[1]{0}', space=sflag, size = 0x4, scoped, tag = 'scoped memory for tpu_custom_call.1']
    #allocation14 [shape = 'u8[512]{0}', space=vmem, size = 0x400, scoped, tag = 'input window, operand 11, single buffered']
    #allocation15 [shape = 'u8[512]{0}', space=vmem, size = 0x400, scoped, tag = 'input window, operand 12, single buffered']
    #allocation16 [shape = 's32[1]{0}', space=sflag, size = 0x4, scoped, tag = 'scoped memory for tpu_custom_call.1']
    #allocation17 [shape = 'u8[8192]{0}', space=vmem, size = 0x2000, scoped, tag = 'output window, operand 0, single buffered']
    %22 = vsyncpa [#allocation4], 0
    %23 = vsyncpa [#allocation7], 0
    %24 = vsyncpa [#allocation10], 0
    %25 = vsyncpa [#allocation13], 0
    %26 = vsyncpa [#allocation16], 0
    %27 = vsyncpa [#allocation5], 0
    // Predicated region
    $region2: #{tpu_custom_call.1} parent=1 // pred_check
      _
    $region3: #{tpu_custom_call.1} parent=1 // pred_check_branch
      %29 = sbr.rel (0) target = $region5
    $region4: #{tpu_custom_call.1} parent=1 // pred_region
      _
    $region5: #{tpu_custom_call.1} parent=1 // pred_fallthru
      _
    // Predicated region
    $region6: #{tpu_custom_call.1} parent=1 // pred_check
      _
    $region7: #{tpu_custom_call.1} parent=1 // pred_check_branch
      %31 = sbr.rel (0) target = $region9
    $region8: #{tpu_custom_call.1} parent=1 // pred_region
      _
    $region9: #{tpu_custom_call.1} parent=1 // pred_fallthru
      _
    // Predicated region
    $region10: #{tpu_custom_call.1} parent=1 // pred_check
      _
    $region11: #{tpu_custom_call.1} parent=1 // pred_check_branch
      %33 = sbr.rel (0) target = $region13
    $region12: #{tpu_custom_call.1} parent=1 // pred_region
      %s35 = ssub.s32 16, 16
      %36 = vsyncadd [#allocation4], %s35
      %s38 = sshll.u32 [#allocation3], 4
      %s39 = int_to_ptr.vmem [resolvable:$true] %s38
      %41 = dma.hbm_to_vmem [thread:$0]  %s2, 16, %s39, [#allocation4]
    $region13: #{tpu_custom_call.1} parent=1 // pred_fallthru
      _
    // Predicated region
    $region14: #{tpu_custom_call.1} parent=1 // pred_check
      _
    $region15: #{tpu_custom_call.1} parent=1 // pred_check_branch
      %43 = sbr.rel (0) target = $region17
    $region16: #{tpu_custom_call.1} parent=1 // pred_region
      _
    $region17: #{tpu_custom_call.1} parent=1 // pred_fallthru
      _
    // Predicated region
    $region18: #{tpu_custom_call.1} parent=1 // pred_check
      _
    $region19: #{tpu_custom_call.1} parent=1 // pred_check_branch
      %45 = sbr.rel (0) target = $region21
    $region20: #{tpu_custom_call.1} parent=1 // pred_region
      %s47 = ssub.s32 16, 16
      %48 = vsyncadd [#allocation7], %s47
      %s50 = sshll.u32 [#allocation6], 4
      %s51 = int_to_ptr.vmem [resolvable:$true] %s50
      %53 = dma.hbm_to_vmem [thread:$0]  %s4, 16, %s51, [#allocation7]
    $region21: #{tpu_custom_call.1} parent=1 // pred_fallthru
      _
    // Predicated region
    $region22: #{tpu_custom_call.1} parent=1 // pred_check
      _
    $region23: #{tpu_custom_call.1} parent=1 // pred_check_branch
      %55 = sbr.rel (0) target = $region25
    $region24: #{tpu_custom_call.1} parent=1 // pred_region
      _
    $region25: #{tpu_custom_call.1} parent=1 // pred_fallthru
      _
    // Predicated region
    $region26: #{tpu_custom_call.1} parent=1 // pred_check
      _
    $region27: #{tpu_custom_call.1} parent=1 // pred_check_branch
      %57 = sbr.rel (0) target = $region29
    $region28: #{tpu_custom_call.1} parent=1 // pred_region
      %s59 = ssub.s32 16, 16
      %60 = vsyncadd [#allocation7], %s59
      %s62 = sshll.u32 [#allocation8], 4
      %s63 = int_to_ptr.vmem [resolvable:$true] %s62
      %65 = dma.hbm_to_vmem [thread:$0]  %s6, 16, %s63, [#allocation7]
    $region29: #{tpu_custom_call.1} parent=1 // pred_fallthru
      _
    // Predicated region
    $region30: #{tpu_custom_call.1} parent=1 // pred_check
      _
    $region31: #{tpu_custom_call.1} parent=1 // pred_check_branch
      %67 = sbr.rel (0) target = $region33
    $region32: #{tpu_custom_call.1} parent=1 // pred_region
      %s69 = ssub.s32 256, 256
      %70 = vsyncadd [#allocation10], %s69
      %s71 = sshll.u32 [#allocation9], 4
      %s72 = int_to_ptr.vmem [resolvable:$true] %s71
      %77 = dma.hbm_to_vmem [thread:$0]  %s7, 256, %s72, [#allocation10], 64, 64, 4
    $region33: #{tpu_custom_call.1} parent=1 // pred_fallthru
      _
    // Predicated region
    $region34: #{tpu_custom_call.1} parent=1 // pred_check
      _
    $region35: #{tpu_custom_call.1} parent=1 // pred_check_branch
      %79 = sbr.rel (0) target = $region37
    $region36: #{tpu_custom_call.1} parent=1 // pred_region
      %s81 = ssub.s32 16, 16
      %82 = vsyncadd [#allocation10], %s81
      %s84 = sshll.u32 [#allocation11], 4
      %s85 = int_to_ptr.vmem [resolvable:$true] %s84
      %87 = dma.hbm_to_vmem [thread:$0]  %s8, 16, %s85, [#allocation10]
    $region37: #{tpu_custom_call.1} parent=1 // pred_fallthru
      _
    // Predicated region
    $region38: #{tpu_custom_call.1} parent=1 // pred_check
      _
    $region39: #{tpu_custom_call.1} parent=1 // pred_check_branch
      %89 = sbr.rel (0) target = $region41
    $region40: #{tpu_custom_call.1} parent=1 // pred_region
      _
    $region41: #{tpu_custom_call.1} parent=1 // pred_fallthru
      _
    // Predicated region
    $region42: #{tpu_custom_call.1} parent=1 // pred_check
      _
    $region43: #{tpu_custom_call.1} parent=1 // pred_check_branch
      %91 = sbr.rel (0) target = $region45
    $region44: #{tpu_custom_call.1} parent=1 // pred_region
      %s93 = ssub.s32 16, 16
      %94 = vsyncadd [#allocation13], %s93
      %s96 = sshll.u32 [#allocation12], 4
      %s97 = int_to_ptr.vmem [resolvable:$true] %s96
      %99 = dma.hbm_to_vmem [thread:$0]  %s10, 16, %s97, [#allocation13]
    $region45: #{tpu_custom_call.1} parent=1 // pred_fallthru
      _
    // Predicated region
    $region46: #{tpu_custom_call.1} parent=1 // pred_check
      _
    $region47: #{tpu_custom_call.1} parent=1 // pred_check_branch
      %101 = sbr.rel (0) target = $region49
    $region48: #{tpu_custom_call.1} parent=1 // pred_region
      %s103 = ssub.s32 16, 16
      %104 = vsyncadd [#allocation13], %s103
      %s106 = sshll.u32 [#allocation14], 4
      %s107 = int_to_ptr.vmem [resolvable:$true] %s106
      %109 = dma.hbm_to_vmem [thread:$0]  %s11, 16, %s107, [#allocation13]
    $region49: #{tpu_custom_call.1} parent=1 // pred_fallthru
      _
    // Predicated region
    $region50: #{tpu_custom_call.1} parent=1 // pred_check
      _
    $region51: #{tpu_custom_call.1} parent=1 // pred_check_branch
      %111 = sbr.rel (0) target = $region53
    $region52: #{tpu_custom_call.1} parent=1 // pred_region
      %s113 = ssub.s32 16, 16
      %114 = vsyncadd [#allocation16], %s113
      %s116 = sshll.u32 [#allocation15], 4
      %s117 = int_to_ptr.vmem [resolvable:$true] %s116
      %119 = dma.hbm_to_vmem [thread:$0]  %s12, 16, %s117, [#allocation16]
    $region53: #{tpu_custom_call.1} parent=1 // pred_fallthru
      _
    // Predicated region
    $region54: #{tpu_custom_call.1} parent=1 // pred_check
      _
    $region55: #{tpu_custom_call.1} parent=1 // pred_check_branch
      %121 = sbr.rel (0) target = $region57
    $region56: #{tpu_custom_call.1} parent=1 // pred_region
      _
    $region57: #{tpu_custom_call.1} parent=1 // pred_fallthru
      _
    // Predicated region
    $region58: #{tpu_custom_call.1} parent=1 // pred_check
      _
    $region59: #{tpu_custom_call.1} parent=1 // pred_check_branch
      %123 = sbr.rel (0) target = $region61
    $region60: #{tpu_custom_call.1} parent=1 // pred_region
      _
    $region61: #{tpu_custom_call.1} parent=1 // pred_fallthru
      _
    // Predicated region
    $region62: #{tpu_custom_call.1} parent=1 // pred_check
      _
    $region63: #{tpu_custom_call.1} parent=1 // pred_check_branch
      %125 = sbr.rel (0) target = $region65
    $region64: #{tpu_custom_call.1} parent=1 // pred_region
      _
    $region65: #{tpu_custom_call.1} parent=1 // pred_fallthru
      _
    // Predicated region
    $region66: #{tpu_custom_call.1} parent=1 // pred_check
      _
    $region67: #{tpu_custom_call.1} parent=1 // pred_check_branch
      %127 = sbr.rel (0) target = $region69
    $region68: #{tpu_custom_call.1} parent=1 // pred_region
      _
    $region69: #{tpu_custom_call.1} parent=1 // pred_fallthru
      _
    // Predicated region
    $region70: #{tpu_custom_call.1} parent=1 // pred_check
      _
    $region71: #{tpu_custom_call.1} parent=1 // pred_check_branch
      %129 = sbr.rel (0) target = $region73
    $region72: #{tpu_custom_call.1} parent=1 // pred_region
      %130 = dma.done [#allocation4], 16
    $region73: #{tpu_custom_call.1} parent=1 // pred_fallthru
      _
    // Predicated region
    $region74: #{tpu_custom_call.1} parent=1 // pred_check
      _
    $region75: #{tpu_custom_call.1} parent=1 // pred_check_branch
      %132 = sbr.rel (0) target = $region77
    $region76: #{tpu_custom_call.1} parent=1 // pred_region
      %133 = dma.done [#allocation7], 16
    $region77: #{tpu_custom_call.1} parent=1 // pred_fallthru
      _
    // Predicated region
    $region78: #{tpu_custom_call.1} parent=1 // pred_check
      _
    $region79: #{tpu_custom_call.1} parent=1 // pred_check_branch
      %135 = sbr.rel (0) target = $region81
    $region80: #{tpu_custom_call.1} parent=1 // pred_region
      %136 = dma.done [#allocation7], 16
    $region81: #{tpu_custom_call.1} parent=1 // pred_fallthru
      _
    // Predicated region
    $region82: #{tpu_custom_call.1} parent=1 // pred_check
      _
    $region83: #{tpu_custom_call.1} parent=1 // pred_check_branch
      %138 = sbr.rel (0) target = $region85
    $region84: #{tpu_custom_call.1} parent=1 // pred_region
      %139 = dma.done [#allocation10], 256
    $region85: #{tpu_custom_call.1} parent=1 // pred_fallthru
      _
    // Predicated region
    $region86: #{tpu_custom_call.1} parent=1 // pred_check
      _
    $region87: #{tpu_custom_call.1} parent=1 // pred_check_branch
      %141 = sbr.rel (0) target = $region89
    $region88: #{tpu_custom_call.1} parent=1 // pred_region
      %142 = dma.done [#allocation10], 16
    $region89: #{tpu_custom_call.1} parent=1 // pred_fallthru
      _
    // Predicated region
    $region90: #{tpu_custom_call.1} parent=1 // pred_check
      _
    $region91: #{tpu_custom_call.1} parent=1 // pred_check_branch
      %144 = sbr.rel (0) target = $region93
    $region92: #{tpu_custom_call.1} parent=1 // pred_region
      %145 = dma.done [#allocation13], 16
    $region93: #{tpu_custom_call.1} parent=1 // pred_fallthru
      _
    // Predicated region
    $region94: #{tpu_custom_call.1} parent=1 // pred_check
      _
    $region95: #{tpu_custom_call.1} parent=1 // pred_check_branch
      %147 = sbr.rel (0) target = $region97
    $region96: #{tpu_custom_call.1} parent=1 // pred_region
      %148 = dma.done [#allocation13], 16
    $region97: #{tpu_custom_call.1} parent=1 // pred_fallthru
      _
    // Predicated region
    $region98: #{tpu_custom_call.1} parent=1 // pred_check
      _
    $region99: #{tpu_custom_call.1} parent=1 // pred_check_branch
      %150 = sbr.rel (0) target = $region101
    $region100: #{tpu_custom_call.1} parent=1 // pred_region
      %151 = dma.done [#allocation16], 16
    $region101: #{tpu_custom_call.1} parent=1 // pred_fallthru
      _
    %v153 = vld [vmem:[%s0] sm:$0x1]
    %v154 = vld [vmem:[%s0 + $0x2] sm:$0x1]
    %v155 = vld [vmem:[%s0 + $0x4] sm:$0x1]
    %v156 = vld [vmem:[%s0 + $0x6] sm:$0x1]
    %v157 = vld [vmem:[%s0 + $0x8] sm:$0x1]
    %v158 = vld [vmem:[%s0 + $0xa] sm:$0x1]
    %v159 = vld [vmem:[%s0 + $0xc] sm:$0x1]
    %v160 = vld [vmem:[%s0 + $0xe] sm:$0x1]
    %v161 = vld [vmem:[%s0 + $0x1] sm:$0x1]
    %v162 = vld [vmem:[%s0 + $0x3] sm:$0x1]
    %v163 = vld [vmem:[%s0 + $0x5] sm:$0x1]
    %v164 = vld [vmem:[%s0 + $0x7] sm:$0x1]
    %v165 = vld [vmem:[%s0 + $0x9] sm:$0x1]
    %v166 = vld [vmem:[%s0 + $0xb] sm:$0x1]
    %v167 = vld [vmem:[%s0 + $0xd] sm:$0x1]
    %v168 = vld [vmem:[%s0 + $0xf] sm:$0x1]
    %v177 = vrot.slane %v154, 7
    %vm178 = vcmask 1041409
    %v179 = vsel %vm178, %v177, %v153
    %v180 = vrot.slane %v155, 6
    %vm181 = vcmask 1042434
    %v182 = vsel %vm181, %v180, %v179
    %v183 = vrot.slane %v156, 5
    %vm184 = vcmask 1043459
    %v185 = vsel %vm184, %v183, %v182
    %v186 = vrot.slane %v157, 4
    %vm187 = vcmask 1044484
    %v188 = vsel %vm187, %v186, %v185
    %v189 = vrot.slane %v158, 3
    %vm190 = vcmask 1045509
    %v191 = vsel %vm190, %v189, %v188
    %v192 = vrot.slane %v159, 2
    %vm193 = vcmask 1046534
    %v194 = vsel %vm193, %v192, %v191
    %v195 = vrot.slane %v160, 1
    %vm196 = vcmask 1047559
    %v197 = vsel %vm196, %v195, %v194
    %v207 = vrot.slane %v162, 7
    %v208 = vsel %vm178, %v207, %v161
    %v209 = vrot.slane %v163, 6
    %v210 = vsel %vm181, %v209, %v208
    %v211 = vrot.slane %v164, 5
    %v212 = vsel %vm184, %v211, %v210
    %v213 = vrot.slane %v165, 4
    %v214 = vsel %vm187, %v213, %v212
    %v215 = vrot.slane %v166, 3
    %v216 = vsel %vm190, %v215, %v214
    %v217 = vrot.slane %v167, 2
    %v218 = vsel %vm193, %v217, %v216
    %v219 = vrot.slane %v168, 1
    %v220 = vsel %vm196, %v219, %v218
    %vm222 = vcmask 261120
    %v223 = vsel %vm222, %v197, 0.0
    %224 = vadd.xlane.f32.xlu0 %v223
    %v225 = vpop.xlane.xlu0 %224
    %v226 = vsel %vm222, %v220, 0.0
    %227 = vadd.xlane.f32.xlu0 %v226
    %v228 = vpop.xlane.xlu0 %227
    %v229 = vrcp.pop 32.0
    %v230 = vmul.f32 %v225, %v229
    %v231 = vmul.f32 %v228, %v229
    %v232 = vsub.f32 %v197, %v230
    %v233 = vsub.f32 %v220, %v231
    %v234 = vmul.f32 %v232, %v232
    %v235 = vmul.f32 %v233, %v233
    %v236 = vsel %vm222, %v234, 0.0
    %237 = vadd.xlane.f32.xlu0 %v236
    %v238 = vpop.xlane.xlu0 %237
    %v239 = vsel %vm222, %v235, 0.0
    %240 = vadd.xlane.f32.xlu0 %v239
    %v241 = vpop.xlane.xlu0 %240
    %v242 = vmul.f32 %v238, %v229
    %v243 = vmul.f32 %v241, %v229
    %v244 = vadd.f32 %v242, 1e-05
    %v245 = vadd.f32 %v243, 1e-05
    %v246 = vrsqrt.pop %v244
    %v247 = vrsqrt.pop %v245
    %v248 = vmul.f32 %v232, %v246
    %v249 = vmul.f32 %v233, %v247
    %v250 = vld [vmem:[%s1] sm:$0x1]
    %v252 = vlaneseq
    %v253 = vshrl.u32 %v252, 7
    %v254 = vsub.s32 0, %v253
    %v255 = vrot.slane %v250, %v254
    %v257 = vmul.f32 %v248, %v255
    %v258 = vmul.f32 %v249, %v255
    %v259 = vld [vmem:[#allocation3] sm:$0x1]
    %v261 = vlaneseq
    %v262 = vshrl.u32 %v261, 7
    %v263 = vsub.s32 0, %v262
    %v264 = vrot.slane %v259, %v263
    %v266 = vadd.f32 %v257, %v264
    %v267 = vadd.f32 %v258, %v264
    %v268 = vpack.c.bf16 %v267, %v266
    %v269 = vld [vmem:[%s3] sm:$0xf]
    %v270 = vld [vmem:[%s3 + $0x4] sm:$0xf]
    %v271 = vld [vmem:[%s3 + $0x8] sm:$0xf]
    %v272 = vld [vmem:[%s3 + $0xc] sm:$0xf]
    %v273 = vld [vmem:[#allocation6] sm:$0x1]
    %v275 = vlaneseq
    %v276 = vshrl.u32 %v275, 7
    %v277 = vsub.s32 0, %v276
    %v278 = vrot.slane %v273, %v277
    %v284 = vunpack.c.l.b16 %v269
    %v285 = vunpack.c.l.b16 %v270
    %v286 = vunpack.c.l.b16 %v271
    %v287 = vunpack.c.l.b16 %v272
    %v288 = vpack.c.b16 %v285, %v284
    %v289 = vpack.c.b16 %v287, %v286
    %v293 = vsel %vm222, %v268, 0
    %295 = vmatprep.subr.bf16.mxu0 0
    %296 = vmatpush1.bf16.msra.mxu0 %v288
    %297 = vmatprep.subr.bf16.mxu0 0
    %298 = vmatpush1.bf16.msra.mxu0 %v289
    %299 = vmatprep.subr.bf16.mxu0 0
    %300 = vmatpush1.bf16.msra.mxu0 0
    %301 = vmatprep.subr.bf16.mxu0 0
    %302 = vmatpush1.bf16.msra.mxu0 0
    %303 = vmatprep.subr.bf16.mxu0 0
    %304 = vmatpush1.bf16.msra.mxu0 0
    %305 = vmatprep.subr.bf16.mxu0 0
    %306 = vmatpush1.bf16.msra.mxu0 0
    %307 = vmatprep.subr.bf16.mxu0 0
    %308 = vmatpush1.bf16.msra.mxu0 0
    %309 = vmatprep.subr.bf16.mxu0 0
    %310 = vmatpush1.bf16.msra.mxu0 0
    %311 = vmatprep.subr.bf16.mxu0 0
    %312 = vmatpush1.bf16.msra.mxu0 0
    %313 = vmatprep.subr.bf16.mxu0 0
    %314 = vmatpush1.bf16.msra.mxu0 0
    %315 = vmatprep.subr.bf16.mxu0 0
    %316 = vmatpush1.bf16.msra.mxu0 0
    %317 = vmatprep.subr.bf16.mxu0 0
    %318 = vmatpush1.bf16.msra.mxu0 0
    %319 = vmatprep.subr.bf16.mxu0 0
    %320 = vmatpush1.bf16.msra.mxu0 0
    %321 = vmatprep.subr.bf16.mxu0 0
    %322 = vmatpush1.bf16.msra.mxu0 0
    %323 = vmatprep.subr.bf16.mxu0 0
    %324 = vmatpush1.bf16.msra.mxu0 0
    %325 = vmatprep.subr.bf16.mxu0 0
    %326 = vmatpush1.bf16.msra.mxu0 0
    %327 = vmatprep.mubr.bf16.mxu0 0
    %328 = vmatmul.mubr.bf16.gmra.mrb[0].mxu0 %v293
    %v329 = vpop.f32.mrb[0].mxu0
    %v330 = vadd.f32 %v278, %v329
    %v331 = vpop.f32.mrb[0].mxu0
    %v332 = vpop.f32.mrb[0].mxu0
    %v333 = vadd.f32 %v278, %v332
    %v334 = vpop.f32.mrb[0].mxu0
    %335 = vdwg.mxu0
    %v336 = vld [vmem:[%s5] sm:$0xf]
    %v337 = vld [vmem:[%s5 + $0x4] sm:$0xf]
    %v338 = vld [vmem:[%s5 + $0x8] sm:$0xf]
    %v339 = vld [vmem:[%s5 + $0xc] sm:$0xf]
    %v340 = vld [vmem:[#allocation8] sm:$0x1]
    %v342 = vlaneseq
    %v343 = vshrl.u32 %v342, 7
    %v344 = vsub.s32 0, %v343
    %v345 = vrot.slane %v340, %v344
    %v351 = vunpack.c.l.b16 %v336
    %v352 = vunpack.c.l.b16 %v337
    %v353 = vunpack.c.l.b16 %v338
    %v354 = vunpack.c.l.b16 %v339
    %v355 = vpack.c.b16 %v352, %v351
    %v356 = vpack.c.b16 %v354, %v353
    %359 = vmatprep.subr.bf16.mxu0 0
    %360 = vmatpush1.bf16.msra.mxu0 %v355
    %361 = vmatprep.subr.bf16.mxu0 0
    %362 = vmatpush1.bf16.msra.mxu0 %v356
    %363 = vmatprep.subr.bf16.mxu0 0
    %364 = vmatpush1.bf16.msra.mxu0 0
    %365 = vmatprep.subr.bf16.mxu0 0
    %366 = vmatpush1.bf16.msra.mxu0 0
    %367 = vmatprep.subr.bf16.mxu0 0
    %368 = vmatpush1.bf16.msra.mxu0 0
    %369 = vmatprep.subr.bf16.mxu0 0
    %370 = vmatpush1.bf16.msra.mxu0 0
    %371 = vmatprep.subr.bf16.mxu0 0
    %372 = vmatpush1.bf16.msra.mxu0 0
    %373 = vmatprep.subr.bf16.mxu0 0
    %374 = vmatpush1.bf16.msra.mxu0 0
    %375 = vmatprep.subr.bf16.mxu0 0
    %376 = vmatpush1.bf16.msra.mxu0 0
    %377 = vmatprep.subr.bf16.mxu0 0
    %378 = vmatpush1.bf16.msra.mxu0 0
    %379 = vmatprep.subr.bf16.mxu0 0
    %380 = vmatpush1.bf16.msra.mxu0 0
    %381 = vmatprep.subr.bf16.mxu0 0
    %382 = vmatpush1.bf16.msra.mxu0 0
    %383 = vmatprep.subr.bf16.mxu0 0
    %384 = vmatpush1.bf16.msra.mxu0 0
    %385 = vmatprep.subr.bf16.mxu0 0
    %386 = vmatpush1.bf16.msra.mxu0 0
    %387 = vmatprep.subr.bf16.mxu0 0
    %388 = vmatpush1.bf16.msra.mxu0 0
    %389 = vmatprep.subr.bf16.mxu0 0
    %390 = vmatpush1.bf16.msra.mxu0 0
    %391 = vmatprep.mubr.bf16.mxu0 0
    %392 = vmatmul.mubr.bf16.gmra.mrb[0].mxu0 %v293
    %v393 = vpop.f32.mrb[0].mxu0
    %v394 = vadd.f32 %v345, %v393
    %v395 = vpop.f32.mrb[0].mxu0
    %v396 = vpop.f32.mrb[0].mxu0
    %v397 = vadd.f32 %v345, %v396
    %v398 = vpop.f32.mrb[0].mxu0
    %399 = vdwg.mxu0
    %v400 = vld [vmem:[#allocation9] sm:$0xf]
    %v401 = vld [vmem:[#allocation9 + $0x4] sm:$0xf]
    %v402 = vld [vmem:[#allocation9 + $0x8] sm:$0xf]
    %v403 = vld [vmem:[#allocation9 + $0xc] sm:$0xf]
    %v404 = vld [vmem:[#allocation11] sm:$0x1]
    %v406 = vlaneseq
    %v407 = vshrl.u32 %v406, 7
    %v408 = vsub.s32 0, %v407
    %v409 = vrot.slane %v404, %v408
    %v415 = vunpack.c.l.b16 %v400
    %v416 = vunpack.c.l.b16 %v401
    %v417 = vunpack.c.l.b16 %v402
    %v418 = vunpack.c.l.b16 %v403
    %v419 = vpack.c.b16 %v416, %v415
    %v420 = vpack.c.b16 %v418, %v417
    %423 = vmatprep.subr.bf16.mxu0 0
    %424 = vmatpush1.bf16.msra.mxu0 %v419
    %425 = vmatprep.subr.bf16.mxu0 0
    %426 = vmatpush1.bf16.msra.mxu0 %v420
    %427 = vmatprep.subr.bf16.mxu0 0
    %428 = vmatpush1.bf16.msra.mxu0 0
    %429 = vmatprep.subr.bf16.mxu0 0
    %430 = vmatpush1.bf16.msra.mxu0 0
    %431 = vmatprep.subr.bf16.mxu0 0
    %432 = vmatpush1.bf16.msra.mxu0 0
    %433 = vmatprep.subr.bf16.mxu0 0
    %434 = vmatpush1.bf16.msra.mxu0 0
    %435 = vmatprep.subr.bf16.mxu0 0
    %436 = vmatpush1.bf16.msra.mxu0 0
    %437 = vmatprep.subr.bf16.mxu0 0
    %438 = vmatpush1.bf16.msra.mxu0 0
    %439 = vmatprep.subr.bf16.mxu0 0
    %440 = vmatpush1.bf16.msra.mxu0 0
    %441 = vmatprep.subr.bf16.mxu0 0
    %442 = vmatpush1.bf16.msra.mxu0 0
    %443 = vmatprep.subr.bf16.mxu0 0
    %444 = vmatpush1.bf16.msra.mxu0 0
    %445 = vmatprep.subr.bf16.mxu0 0
    %446 = vmatpush1.bf16.msra.mxu0 0
    %447 = vmatprep.subr.bf16.mxu0 0
    %448 = vmatpush1.bf16.msra.mxu0 0
    %449 = vmatprep.subr.bf16.mxu0 0
    %450 = vmatpush1.bf16.msra.mxu0 0
    %451 = vmatprep.subr.bf16.mxu0 0
    %452 = vmatpush1.bf16.msra.mxu0 0
    %453 = vmatprep.subr.bf16.mxu0 0
    %454 = vmatpush1.bf16.msra.mxu0 0
    %455 = vmatprep.mubr.bf16.mxu0 0
    %456 = vmatmul.mubr.bf16.gmra.mrb[0].mxu0 %v293
    %v457 = vpop.f32.mrb[0].mxu0
    %v458 = vadd.f32 %v409, %v457
    %v459 = vpop.f32.mrb[0].mxu0
    %v460 = vpop.f32.mrb[0].mxu0
    %v461 = vadd.f32 %v409, %v460
    %v462 = vpop.f32.mrb[0].mxu0
    %463 = vdwg.mxu0
    %v464 = vpack.c.bf16 %v330, %v330
    %v465 = vpack.c.bf16 %v333, %v333
    %v466 = vpack.c.bf16 %v394, %v394
    %v467 = vpack.c.bf16 %v397, %v397
    %v468 = vpack.c.bf16 %v458, %v458
    %v469 = vpack.c.bf16 %v461, %v461
    %vm470 = vcmask 64512
    %v472 = vsel %vm470, %v464, 0
    %v475 = vsel %vm470, %v466, 0
    %477 = vmatprep.subr.bf16.mxu0 0
    %478 = vmatpush1.bf16.xpose.msra.mxu0 %v475
    %479 = vmatprep.subr.bf16.mxu0 0
    %480 = vmatpush1.bf16.xpose.msra.mxu0 0
    %481 = vmatprep.subr.bf16.mxu0 0
    %482 = vmatpush1.bf16.xpose.msra.mxu0 0
    %483 = vmatprep.subr.bf16.mxu0 0
    %484 = vmatpush1.bf16.xpose.msra.mxu0 0
    %485 = vmatprep.subr.bf16.mxu0 0
    %486 = vmatpush1.bf16.xpose.msra.mxu0 0
    %487 = vmatprep.subr.bf16.mxu0 0
    %488 = vmatpush1.bf16.xpose.msra.mxu0 0
    %489 = vmatprep.subr.bf16.mxu0 0
    %490 = vmatpush1.bf16.xpose.msra.mxu0 0
    %491 = vmatprep.subr.bf16.mxu0 0
    %492 = vmatpush1.bf16.xpose.msra.mxu0 0
    %493 = vmatprep.subr.bf16.mxu0 0
    %494 = vmatpush1.bf16.xpose.msra.mxu0 0
    %495 = vmatprep.subr.bf16.mxu0 0
    %496 = vmatpush1.bf16.xpose.msra.mxu0 0
    %497 = vmatprep.subr.bf16.mxu0 0
    %498 = vmatpush1.bf16.xpose.msra.mxu0 0
    %499 = vmatprep.subr.bf16.mxu0 0
    %500 = vmatpush1.bf16.xpose.msra.mxu0 0
    %501 = vmatprep.subr.bf16.mxu0 0
    %502 = vmatpush1.bf16.xpose.msra.mxu0 0
    %503 = vmatprep.subr.bf16.mxu0 0
    %504 = vmatpush1.bf16.xpose.msra.mxu0 0
    %505 = vmatprep.subr.bf16.mxu0 0
    %506 = vmatpush1.bf16.xpose.msra.mxu0 0
    %507 = vmatprep.subr.bf16.mxu0 0
    %508 = vmatpush1.bf16.xpose.msra.mxu0 0
    %509 = vmatprep.mubr.bf16.mxu0 0
    %510 = vmatmul.mubr.bf16.gmra.mrb[0].mxu0 %v472
    %v511 = vpop.f32.mrb[0].mxu0
    %v512 = vadd.f32 0.0, %v511
    %v513 = vpop.f32.mrb[0].mxu0
    %v514 = vpop.f32.mrb[0].mxu0
    %v515 = vpop.f32.mrb[0].mxu0
    %516 = vdwg.mxu0
    %v518 = vsel %vm470, %v465, 0
    %v521 = vsel %vm470, %v467, 0
    %523 = vmatprep.subr.bf16.mxu0 0
    %524 = vmatpush1.bf16.xpose.msra.mxu0 %v521
    %525 = vmatprep.subr.bf16.mxu0 0
    %526 = vmatpush1.bf16.xpose.msra.mxu0 0
    %527 = vmatprep.subr.bf16.mxu0 0
    %528 = vmatpush1.bf16.xpose.msra.mxu0 0
    %529 = vmatprep.subr.bf16.mxu0 0
    %530 = vmatpush1.bf16.xpose.msra.mxu0 0
    %531 = vmatprep.subr.bf16.mxu0 0
    %532 = vmatpush1.bf16.xpose.msra.mxu0 0
    %533 = vmatprep.subr.bf16.mxu0 0
    %534 = vmatpush1.bf16.xpose.msra.mxu0 0
    %535 = vmatprep.subr.bf16.mxu0 0
    %536 = vmatpush1.bf16.xpose.msra.mxu0 0
    %537 = vmatprep.subr.bf16.mxu0 0
    %538 = vmatpush1.bf16.xpose.msra.mxu0 0
    %539 = vmatprep.subr.bf16.mxu0 0
    %540 = vmatpush1.bf16.xpose.msra.mxu0 0
    %541 = vmatprep.subr.bf16.mxu0 0
    %542 = vmatpush1.bf16.xpose.msra.mxu0 0
    %543 = vmatprep.subr.bf16.mxu0 0
    %544 = vmatpush1.bf16.xpose.msra.mxu0 0
    %545 = vmatprep.subr.bf16.mxu0 0
    %546 = vmatpush1.bf16.xpose.msra.mxu0 0
    %547 = vmatprep.subr.bf16.mxu0 0
    %548 = vmatpush1.bf16.xpose.msra.mxu0 0
    %549 = vmatprep.subr.bf16.mxu0 0
    %550 = vmatpush1.bf16.xpose.msra.mxu0 0
    %551 = vmatprep.subr.bf16.mxu0 0
    %552 = vmatpush1.bf16.xpose.msra.mxu0 0
    %553 = vmatprep.subr.bf16.mxu0 0
    %554 = vmatpush1.bf16.xpose.msra.mxu0 0
    %555 = vmatprep.mubr.bf16.mxu0 0
    %556 = vmatmul.mubr.bf16.gmra.mrb[0].mxu0 %v518
    %v557 = vpop.f32.mrb[0].mxu0
    %v558 = vadd.f32 0.0, %v557
    %v559 = vpop.f32.mrb[0].mxu0
    %v560 = vpop.f32.mrb[0].mxu0
    %v561 = vpop.f32.mrb[0].mxu0
    %562 = vdwg.mxu0
    %v563 = vsel %vm470, %v512, -inf
    %564 = vmax.xlane.f32.xlu0 %v563
    %v565 = vpop.xlane.xlu0 %564
    %v566 = vsel %vm470, %v558, -inf
    %567 = vmax.xlane.f32.xlu0 %v566
    %v568 = vpop.xlane.xlu0 %567
    %v569 = vsub.f32 %v512, %v565
    %v570 = vsub.f32 %v558, %v568
    %v571 = vmul.f32 %v569, 1.442695
    %v572 = vpow.pop %v571
    %v573 = vmul.f32 %v570, 1.442695
    %v574 = vpow.pop %v573
    %v575 = vsel %vm470, %v572, 0.0
    %576 = vadd.xlane.f32.xlu0 %v575
    %v577 = vpop.xlane.xlu0 %576
    %v578 = vsel %vm470, %v574, 0.0
    %579 = vadd.xlane.f32.xlu0 %v578
    %v580 = vpop.xlane.xlu0 %579
    %v581 = vrcp.pop %v577
    %v582 = vrcp.pop %v580
    %v583 = vpack.c.bf16 %v572, %v572
    %v584 = vpack.c.bf16 %v574, %v574
    %v586 = vsel %vm470, %v583, 0
    %vm588 = vcmask 1043456
    %v590 = vsel %vm588, %v468, 0
    %592 = vmatprep.subr.bf16.mxu0 0
    %593 = vmatpush1.bf16.msra.mxu0 %v590
    %594 = vmatprep.subr.bf16.mxu0 0
    %595 = vmatpush1.bf16.msra.mxu0 0
    %596 = vmatprep.subr.bf16.mxu0 0
    %597 = vmatpush1.bf16.msra.mxu0 0
    %598 = vmatprep.subr.bf16.mxu0 0
    %599 = vmatpush1.bf16.msra.mxu0 0
    %600 = vmatprep.subr.bf16.mxu0 0
    %601 = vmatpush1.bf16.msra.mxu0 0
    %602 = vmatprep.subr.bf16.mxu0 0
    %603 = vmatpush1.bf16.msra.mxu0 0
    %604 = vmatprep.subr.bf16.mxu0 0
    %605 = vmatpush1.bf16.msra.mxu0 0
    %606 = vmatprep.subr.bf16.mxu0 0
    %607 = vmatpush1.bf16.msra.mxu0 0
    %608 = vmatprep.subr.bf16.mxu0 0
    %609 = vmatpush1.bf16.msra.mxu0 0
    %610 = vmatprep.subr.bf16.mxu0 0
    %611 = vmatpush1.bf16.msra.mxu0 0
    %612 = vmatprep.subr.bf16.mxu0 0
    %613 = vmatpush1.bf16.msra.mxu0 0
    %614 = vmatprep.subr.bf16.mxu0 0
    %615 = vmatpush1.bf16.msra.mxu0 0
    %616 = vmatprep.subr.bf16.mxu0 0
    %617 = vmatpush1.bf16.msra.mxu0 0
    %618 = vmatprep.subr.bf16.mxu0 0
    %619 = vmatpush1.bf16.msra.mxu0 0
    %620 = vmatprep.subr.bf16.mxu0 0
    %621 = vmatpush1.bf16.msra.mxu0 0
    %622 = vmatprep.subr.bf16.mxu0 0
    %623 = vmatpush1.bf16.msra.mxu0 0
    %624 = vmatprep.mubr.bf16.mxu0 0
    %625 = vmatmul.mubr.bf16.gmra.mrb[0].mxu0 %v586
    %v626 = vpop.f32.mrb[0].mxu0
    %v627 = vadd.f32 0.0, %v626
    %v628 = vpop.f32.mrb[0].mxu0
    %v629 = vpop.f32.mrb[0].mxu0
    %v630 = vpop.f32.mrb[0].mxu0
    %631 = vdwg.mxu0
    %v633 = vsel %vm470, %v584, 0
    %v636 = vsel %vm588, %v469, 0
    %638 = vmatprep.subr.bf16.mxu0 0
    %639 = vmatpush1.bf16.msra.mxu0 %v636
    %640 = vmatprep.subr.bf16.mxu0 0
    %641 = vmatpush1.bf16.msra.mxu0 0
    %642 = vmatprep.subr.bf16.mxu0 0
    %643 = vmatpush1.bf16.msra.mxu0 0
    %644 = vmatprep.subr.bf16.mxu0 0
    %645 = vmatpush1.bf16.msra.mxu0 0
    %646 = vmatprep.subr.bf16.mxu0 0
    %647 = vmatpush1.bf16.msra.mxu0 0
    %648 = vmatprep.subr.bf16.mxu0 0
    %649 = vmatpush1.bf16.msra.mxu0 0
    %650 = vmatprep.subr.bf16.mxu0 0
    %651 = vmatpush1.bf16.msra.mxu0 0
    %652 = vmatprep.subr.bf16.mxu0 0
    %653 = vmatpush1.bf16.msra.mxu0 0
    %654 = vmatprep.subr.bf16.mxu0 0
    %655 = vmatpush1.bf16.msra.mxu0 0
    %656 = vmatprep.subr.bf16.mxu0 0
    %657 = vmatpush1.bf16.msra.mxu0 0
    %658 = vmatprep.subr.bf16.mxu0 0
    %659 = vmatpush1.bf16.msra.mxu0 0
    %660 = vmatprep.subr.bf16.mxu0 0
    %661 = vmatpush1.bf16.msra.mxu0 0
    %662 = vmatprep.subr.bf16.mxu0 0
    %663 = vmatpush1.bf16.msra.mxu0 0
    %664 = vmatprep.subr.bf16.mxu0 0
    %665 = vmatpush1.bf16.msra.mxu0 0
    %666 = vmatprep.subr.bf16.mxu0 0
    %667 = vmatpush1.bf16.msra.mxu0 0
    %668 = vmatprep.subr.bf16.mxu0 0
    %669 = vmatpush1.bf16.msra.mxu0 0
    %670 = vmatprep.mubr.bf16.mxu0 0
    %671 = vmatmul.mubr.bf16.gmra.mrb[0].mxu0 %v633
    %v672 = vpop.f32.mrb[0].mxu0
    %v673 = vadd.f32 0.0, %v672
    %v674 = vpop.f32.mrb[0].mxu0
    %v675 = vpop.f32.mrb[0].mxu0
    %v676 = vpop.f32.mrb[0].mxu0
    %677 = vdwg.mxu0
    %v678 = vmul.f32 %v627, %v581
    %v679 = vmul.f32 %v673, %v582
    %680 = vst.msk [vmem:[#allocation2] sm:$0xff] %vm470, %v678
    %681 = vst.msk [vmem:[#allocation2 + $0x8] sm:$0xff] %vm470, %v679
    %683 = vrot.lane.b32.xlu0 %v464, 120
    %v684 = vpop.permute.xlu0 %683
    %686 = vrot.lane.b32.xlu0 %v466, 120
    %v687 = vpop.permute.xlu0 %686
    %v689 = vsel %vm470, %v684, 0
    %v692 = vsel %vm470, %v687, 0
    %694 = vmatprep.subr.bf16.mxu0 0
    %695 = vmatpush1.bf16.xpose.msra.mxu0 %v692
    %696 = vmatprep.subr.bf16.mxu0 0
    %697 = vmatpush1.bf16.xpose.msra.mxu0 0
    %698 = vmatprep.subr.bf16.mxu0 0
    %699 = vmatpush1.bf16.xpose.msra.mxu0 0
    %700 = vmatprep.subr.bf16.mxu0 0
    %701 = vmatpush1.bf16.xpose.msra.mxu0 0
    %702 = vmatprep.subr.bf16.mxu0 0
    %703 = vmatpush1.bf16.xpose.msra.mxu0 0
    %704 = vmatprep.subr.bf16.mxu0 0
    %705 = vmatpush1.bf16.xpose.msra.mxu0 0
    %706 = vmatprep.subr.bf16.mxu0 0
    %707 = vmatpush1.bf16.xpose.msra.mxu0 0
    %708 = vmatprep.subr.bf16.mxu0 0
    %709 = vmatpush1.bf16.xpose.msra.mxu0 0
    %710 = vmatprep.subr.bf16.mxu0 0
    %711 = vmatpush1.bf16.xpose.msra.mxu0 0
    %712 = vmatprep.subr.bf16.mxu0 0
    %713 = vmatpush1.bf16.xpose.msra.mxu0 0
    %714 = vmatprep.subr.bf16.mxu0 0
    %715 = vmatpush1.bf16.xpose.msra.mxu0 0
    %716 = vmatprep.subr.bf16.mxu0 0
    %717 = vmatpush1.bf16.xpose.msra.mxu0 0
    %718 = vmatprep.subr.bf16.mxu0 0
    %719 = vmatpush1.bf16.xpose.msra.mxu0 0
    %720 = vmatprep.subr.bf16.mxu0 0
    %721 = vmatpush1.bf16.xpose.msra.mxu0 0
    %722 = vmatprep.subr.bf16.mxu0 0
    %723 = vmatpush1.bf16.xpose.msra.mxu0 0
    %724 = vmatprep.subr.bf16.mxu0 0
    %725 = vmatpush1.bf16.xpose.msra.mxu0 0
    %726 = vmatprep.mubr.bf16.mxu0 0
    %727 = vmatmul.mubr.bf16.gmra.mrb[0].mxu0 %v689
    %v728 = vpop.f32.mrb[0].mxu0
    %v729 = vadd.f32 0.0, %v728
    %v730 = vpop.f32.mrb[0].mxu0
    %v731 = vpop.f32.mrb[0].mxu0
    %v732 = vpop.f32.mrb[0].mxu0
    %733 = vdwg.mxu0
    %735 = vrot.lane.b32.xlu0 %v465, 120
    %v736 = vpop.permute.xlu0 %735
    %738 = vrot.lane.b32.xlu0 %v467, 120
    %v739 = vpop.permute.xlu0 %738
    %v741 = vsel %vm470, %v736, 0
    %v744 = vsel %vm470, %v739, 0
    %746 = vmatprep.subr.bf16.mxu0 0
    %747 = vmatpush1.bf16.xpose.msra.mxu0 %v744
    %748 = vmatprep.subr.bf16.mxu0 0
    %749 = vmatpush1.bf16.xpose.msra.mxu0 0
    %750 = vmatprep.subr.bf16.mxu0 0
    %751 = vmatpush1.bf16.xpose.msra.mxu0 0
    %752 = vmatprep.subr.bf16.mxu0 0
    %753 = vmatpush1.bf16.xpose.msra.mxu0 0
    %754 = vmatprep.subr.bf16.mxu0 0
    %755 = vmatpush1.bf16.xpose.msra.mxu0 0
    %756 = vmatprep.subr.bf16.mxu0 0
    %757 = vmatpush1.bf16.xpose.msra.mxu0 0
    %758 = vmatprep.subr.bf16.mxu0 0
    %759 = vmatpush1.bf16.xpose.msra.mxu0 0
    %760 = vmatprep.subr.bf16.mxu0 0
    %761 = vmatpush1.bf16.xpose.msra.mxu0 0
    %762 = vmatprep.subr.bf16.mxu0 0
    %763 = vmatpush1.bf16.xpose.msra.mxu0 0
    %764 = vmatprep.subr.bf16.mxu0 0
    %765 = vmatpush1.bf16.xpose.msra.mxu0 0
    %766 = vmatprep.subr.bf16.mxu0 0
    %767 = vmatpush1.bf16.xpose.msra.mxu0 0
    %768 = vmatprep.subr.bf16.mxu0 0
    %769 = vmatpush1.bf16.xpose.msra.mxu0 0
    %770 = vmatprep.subr.bf16.mxu0 0
    %771 = vmatpush1.bf16.xpose.msra.mxu0 0
    %772 = vmatprep.subr.bf16.mxu0 0
    %773 = vmatpush1.bf16.xpose.msra.mxu0 0
    %774 = vmatprep.subr.bf16.mxu0 0
    %775 = vmatpush1.bf16.xpose.msra.mxu0 0
    %776 = vmatprep.subr.bf16.mxu0 0
    %777 = vmatpush1.bf16.xpose.msra.mxu0 0
    %778 = vmatprep.mubr.bf16.mxu0 0
    %779 = vmatmul.mubr.bf16.gmra.mrb[0].mxu0 %v741
    %v780 = vpop.f32.mrb[0].mxu0
    %v781 = vadd.f32 0.0, %v780
    %v782 = vpop.f32.mrb[0].mxu0
    %v783 = vpop.f32.mrb[0].mxu0
    %v784 = vpop.f32.mrb[0].mxu0
    %785 = vdwg.mxu0
    %v786 = vsel %vm470, %v729, -inf
    %787 = vmax.xlane.f32.xlu0 %v786
    %v788 = vpop.xlane.xlu0 %787
    %v789 = vsel %vm470, %v781, -inf
    %790 = vmax.xlane.f32.xlu0 %v789
    %v791 = vpop.xlane.xlu0 %790
    %v792 = vsub.f32 %v729, %v788
    %v793 = vsub.f32 %v781, %v791
    %v794 = vmul.f32 %v792, 1.442695
    %v795 = vpow.pop %v794
    %v796 = vmul.f32 %v793, 1.442695
    %v797 = vpow.pop %v796
    %v798 = vsel %vm470, %v795, 0.0
    %799 = vadd.xlane.f32.xlu0 %v798
    %v800 = vpop.xlane.xlu0 %799
    %v801 = vsel %vm470, %v797, 0.0
    %802 = vadd.xlane.f32.xlu0 %v801
    %v803 = vpop.xlane.xlu0 %802
    %v804 = vrcp.pop %v800
    %v805 = vrcp.pop %v803
    %v806 = vpack.c.bf16 %v795, %v795
    %v807 = vpack.c.bf16 %v797, %v797
    %809 = vrot.lane.b32.xlu0 %v468, 120
    %v810 = vpop.permute.xlu0 %809
    %v812 = vsel %vm470, %v806, 0
    %v815 = vsel %vm588, %v810, 0
    %817 = vmatprep.subr.bf16.mxu0 0
    %818 = vmatpush1.bf16.msra.mxu0 %v815
    %819 = vmatprep.subr.bf16.mxu0 0
    %820 = vmatpush1.bf16.msra.mxu0 0
    %821 = vmatprep.subr.bf16.mxu0 0
    %822 = vmatpush1.bf16.msra.mxu0 0
    %823 = vmatprep.subr.bf16.mxu0 0
    %824 = vmatpush1.bf16.msra.mxu0 0
    %825 = vmatprep.subr.bf16.mxu0 0
    %826 = vmatpush1.bf16.msra.mxu0 0
    %827 = vmatprep.subr.bf16.mxu0 0
    %828 = vmatpush1.bf16.msra.mxu0 0
    %829 = vmatprep.subr.bf16.mxu0 0
    %830 = vmatpush1.bf16.msra.mxu0 0
    %831 = vmatprep.subr.bf16.mxu0 0
    %832 = vmatpush1.bf16.msra.mxu0 0
    %833 = vmatprep.subr.bf16.mxu0 0
    %834 = vmatpush1.bf16.msra.mxu0 0
    %835 = vmatprep.subr.bf16.mxu0 0
    %836 = vmatpush1.bf16.msra.mxu0 0
    %837 = vmatprep.subr.bf16.mxu0 0
    %838 = vmatpush1.bf16.msra.mxu0 0
    %839 = vmatprep.subr.bf16.mxu0 0
    %840 = vmatpush1.bf16.msra.mxu0 0
    %841 = vmatprep.subr.bf16.mxu0 0
    %842 = vmatpush1.bf16.msra.mxu0 0
    %843 = vmatprep.subr.bf16.mxu0 0
    %844 = vmatpush1.bf16.msra.mxu0 0
    %845 = vmatprep.subr.bf16.mxu0 0
    %846 = vmatpush1.bf16.msra.mxu0 0
    %847 = vmatprep.subr.bf16.mxu0 0
    %848 = vmatpush1.bf16.msra.mxu0 0
    %849 = vmatprep.mubr.bf16.mxu0 0
    %850 = vmatmul.mubr.bf16.gmra.mrb[0].mxu0 %v812
    %v851 = vpop.f32.mrb[0].mxu0
    %v852 = vadd.f32 0.0, %v851
    %v853 = vpop.f32.mrb[0].mxu0
    %v854 = vpop.f32.mrb[0].mxu0
    %v855 = vpop.f32.mrb[0].mxu0
    %856 = vdwg.mxu0
    %858 = vrot.lane.b32.xlu0 %v469, 120
    %v859 = vpop.permute.xlu0 %858
    %v861 = vsel %vm470, %v807, 0
    %v864 = vsel %vm588, %v859, 0
    %866 = vmatprep.subr.bf16.mxu0 0
    %867 = vmatpush1.bf16.msra.mxu0 %v864
    %868 = vmatprep.subr.bf16.mxu0 0
    %869 = vmatpush1.bf16.msra.mxu0 0
    %870 = vmatprep.subr.bf16.mxu0 0
    %871 = vmatpush1.bf16.msra.mxu0 0
    %872 = vmatprep.subr.bf16.mxu0 0
    %873 = vmatpush1.bf16.msra.mxu0 0
    %874 = vmatprep.subr.bf16.mxu0 0
    %875 = vmatpush1.bf16.msra.mxu0 0
    %876 = vmatprep.subr.bf16.mxu0 0
    %877 = vmatpush1.bf16.msra.mxu0 0
    %878 = vmatprep.subr.bf16.mxu0 0
    %879 = vmatpush1.bf16.msra.mxu0 0
    %880 = vmatprep.subr.bf16.mxu0 0
    %881 = vmatpush1.bf16.msra.mxu0 0
    %882 = vmatprep.subr.bf16.mxu0 0
    %883 = vmatpush1.bf16.msra.mxu0 0
    %884 = vmatprep.subr.bf16.mxu0 0
    %885 = vmatpush1.bf16.msra.mxu0 0
    %886 = vmatprep.subr.bf16.mxu0 0
    %887 = vmatpush1.bf16.msra.mxu0 0
    %888 = vmatprep.subr.bf16.mxu0 0
    %889 = vmatpush1.bf16.msra.mxu0 0
    %890 = vmatprep.subr.bf16.mxu0 0
    %891 = vmatpush1.bf16.msra.mxu0 0
    %892 = vmatprep.subr.bf16.mxu0 0
    %893 = vmatpush1.bf16.msra.mxu0 0
    %894 = vmatprep.subr.bf16.mxu0 0
    %895 = vmatpush1.bf16.msra.mxu0 0
    %896 = vmatprep.subr.bf16.mxu0 0
    %897 = vmatpush1.bf16.msra.mxu0 0
    %898 = vmatprep.mubr.bf16.mxu0 0
    %899 = vmatmul.mubr.bf16.gmra.mrb[0].mxu0 %v861
    %v900 = vpop.f32.mrb[0].mxu0
    %v901 = vadd.f32 0.0, %v900
    %v902 = vpop.f32.mrb[0].mxu0
    %v903 = vpop.f32.mrb[0].mxu0
    %v904 = vpop.f32.mrb[0].mxu0
    %905 = vdwg.mxu0
    %v906 = vmul.f32 %v852, %v804
    %v907 = vmul.f32 %v901, %v805
    %910 = vrot.lane.b32.xlu0 %v906, 8
    %v911 = vpop.permute.xlu0 %910
    %912 = vrot.lane.b32.xlu0 %v907, 8
    %v913 = vpop.permute.xlu0 %912
    %vm916 = vcmask 130112
    %917 = vst.msk [vmem:[#allocation2] sm:$0xff] %vm916, %v911
    %918 = vst.msk [vmem:[#allocation2 + $0x8] sm:$0xff] %vm916, %v913
    %919 = vrot.lane.b32.xlu0 %v464, 112
    %v920 = vpop.permute.xlu0 %919
    %921 = vrot.lane.b32.xlu0 %v466, 112
    %v922 = vpop.permute.xlu0 %921
    %v924 = vsel %vm470, %v920, 0
    %v927 = vsel %vm470, %v922, 0
    %929 = vmatprep.subr.bf16.mxu0 0
    %930 = vmatpush1.bf16.xpose.msra.mxu0 %v927
    %931 = vmatprep.subr.bf16.mxu0 0
    %932 = vmatpush1.bf16.xpose.msra.mxu0 0
    %933 = vmatprep.subr.bf16.mxu0 0
    %934 = vmatpush1.bf16.xpose.msra.mxu0 0
    %935 = vmatprep.subr.bf16.mxu0 0
    %936 = vmatpush1.bf16.xpose.msra.mxu0 0
    %937 = vmatprep.subr.bf16.mxu0 0
    %938 = vmatpush1.bf16.xpose.msra.mxu0 0
    %939 = vmatprep.subr.bf16.mxu0 0
    %940 = vmatpush1.bf16.xpose.msra.mxu0 0
    %941 = vmatprep.subr.bf16.mxu0 0
    %942 = vmatpush1.bf16.xpose.msra.mxu0 0
    %943 = vmatprep.subr.bf16.mxu0 0
    %944 = vmatpush1.bf16.xpose.msra.mxu0 0
    %945 = vmatprep.subr.bf16.mxu0 0
    %946 = vmatpush1.bf16.xpose.msra.mxu0 0
    %947 = vmatprep.subr.bf16.mxu0 0
    %948 = vmatpush1.bf16.xpose.msra.mxu0 0
    %949 = vmatprep.subr.bf16.mxu0 0
    %950 = vmatpush1.bf16.xpose.msra.mxu0 0
    %951 = vmatprep.subr.bf16.mxu0 0
    %952 = vmatpush1.bf16.xpose.msra.mxu0 0
    %953 = vmatprep.subr.bf16.mxu0 0
    %954 = vmatpush1.bf16.xpose.msra.mxu0 0
    %955 = vmatprep.subr.bf16.mxu0 0
    %956 = vmatpush1.bf16.xpose.msra.mxu0 0
    %957 = vmatprep.subr.bf16.mxu0 0
    %958 = vmatpush1.bf16.xpose.msra.mxu0 0
    %959 = vmatprep.subr.bf16.mxu0 0
    %960 = vmatpush1.bf16.xpose.msra.mxu0 0
    %961 = vmatprep.mubr.bf16.mxu0 0
    %962 = vmatmul.mubr.bf16.gmra.mrb[0].mxu0 %v924
    %v963 = vpop.f32.mrb[0].mxu0
    %v964 = vadd.f32 0.0, %v963
    %v965 = vpop.f32.mrb[0].mxu0
    %v966 = vpop.f32.mrb[0].mxu0
    %v967 = vpop.f32.mrb[0].mxu0
    %968 = vdwg.mxu0
    %969 = vrot.lane.b32.xlu0 %v465, 112
    %v970 = vpop.permute.xlu0 %969
    %971 = vrot.lane.b32.xlu0 %v467, 112
    %v972 = vpop.permute.xlu0 %971
    %v974 = vsel %vm470, %v970, 0
    %v977 = vsel %vm470, %v972, 0
    %979 = vmatprep.subr.bf16.mxu0 0
    %980 = vmatpush1.bf16.xpose.msra.mxu0 %v977
    %981 = vmatprep.subr.bf16.mxu0 0
    %982 = vmatpush1.bf16.xpose.msra.mxu0 0
    %983 = vmatprep.subr.bf16.mxu0 0
    %984 = vmatpush1.bf16.xpose.msra.mxu0 0
    %985 = vmatprep.subr.bf16.mxu0 0
    %986 = vmatpush1.bf16.xpose.msra.mxu0 0
    %987 = vmatprep.subr.bf16.mxu0 0
    %988 = vmatpush1.bf16.xpose.msra.mxu0 0
    %989 = vmatprep.subr.bf16.mxu0 0
    %990 = vmatpush1.bf16.xpose.msra.mxu0 0
    %991 = vmatprep.subr.bf16.mxu0 0
    %992 = vmatpush1.bf16.xpose.msra.mxu0 0
    %993 = vmatprep.subr.bf16.mxu0 0
    %994 = vmatpush1.bf16.xpose.msra.mxu0 0
    %995 = vmatprep.subr.bf16.mxu0 0
    %996 = vmatpush1.bf16.xpose.msra.mxu0 0
    %997 = vmatprep.subr.bf16.mxu0 0
    %998 = vmatpush1.bf16.xpose.msra.mxu0 0
    %999 = vmatprep.subr.bf16.mxu0 0
    %1000 = vmatpush1.bf16.xpose.msra.mxu0 0
    %1001 = vmatprep.subr.bf16.mxu0 0
    %1002 = vmatpush1.bf16.xpose.msra.mxu0 0
    %1003 = vmatprep.subr.bf16.mxu0 0
    %1004 = vmatpush1.bf16.xpose.msra.mxu0 0
    %1005 = vmatprep.subr.bf16.mxu0 0
    %1006 = vmatpush1.bf16.xpose.msra.mxu0 0
    %1007 = vmatprep.subr.bf16.mxu0 0
    %1008 = vmatpush1.bf16.xpose.msra.mxu0 0
    %1009 = vmatprep.subr.bf16.mxu0 0
    %1010 = vmatpush1.bf16.xpose.msra.mxu0 0
    %1011 = vmatprep.mubr.bf16.mxu0 0
    %1012 = vmatmul.mubr.bf16.gmra.mrb[0].mxu0 %v974
    %v1013 = vpop.f32.mrb[0].mxu0
    %v1014 = vadd.f32 0.0, %v1013
    %v1015 = vpop.f32.mrb[0].mxu0
    %v1016 = vpop.f32.mrb[0].mxu0
    %v1017 = vpop.f32.mrb[0].mxu0
    %1018 = vdwg.mxu0
    %v1019 = vsel %vm470, %v964, -inf
    %1020 = vmax.xlane.f32.xlu0 %v1019
    %v1021 = vpop.xlane.xlu0 %1020
    %v1022 = vsel %vm470, %v1014, -inf
    %1023 = vmax.xlane.f32.xlu0 %v1022
    %v1024 = vpop.xlane.xlu0 %1023
    %v1025 = vsub.f32 %v964, %v1021
    %v1026 = vsub.f32 %v1014, %v1024
    %v1027 = vmul.f32 %v1025, 1.442695
    %v1028 = vpow.pop %v1027
    %v1029 = vmul.f32 %v1026, 1.442695
    %v1030 = vpow.pop %v1029
    %v1031 = vsel %vm470, %v1028, 0.0
    %1032 = vadd.xlane.f32.xlu0 %v1031
    %v1033 = vpop.xlane.xlu0 %1032
    %v1034 = vsel %vm470, %v1030, 0.0
    %1035 = vadd.xlane.f32.xlu0 %v1034
    %v1036 = vpop.xlane.xlu0 %1035
    %v1037 = vrcp.pop %v1033
    %v1038 = vrcp.pop %v1036
    %v1039 = vpack.c.bf16 %v1028, %v1028
    %v1040 = vpack.c.bf16 %v1030, %v1030
    %1041 = vrot.lane.b32.xlu0 %v468, 112
    %v1042 = vpop.permute.xlu0 %1041
    %v1044 = vsel %vm470, %v1039, 0
    %v1047 = vsel %vm588, %v1042, 0
    %1049 = vmatprep.subr.bf16.mxu0 0
    %1050 = vmatpush1.bf16.msra.mxu0 %v1047
    %1051 = vmatprep.subr.bf16.mxu0 0
    %1052 = vmatpush1.bf16.msra.mxu0 0
    %1053 = vmatprep.subr.bf16.mxu0 0
    %1054 = vmatpush1.bf16.msra.mxu0 0
    %1055 = vmatprep.subr.bf16.mxu0 0
    %1056 = vmatpush1.bf16.msra.mxu0 0
    %1057 = vmatprep.subr.bf16.mxu0 0
    %1058 = vmatpush1.bf16.msra.mxu0 0
    %1059 = vmatprep.subr.bf16.mxu0 0
    %1060 = vmatpush1.bf16.msra.mxu0 0
    %1061 = vmatprep.subr.bf16.mxu0 0
    %1062 = vmatpush1.bf16.msra.mxu0 0
    %1063 = vmatprep.subr.bf16.mxu0 0
    %1064 = vmatpush1.bf16.msra.mxu0 0
    %1065 = vmatprep.subr.bf16.mxu0 0
    %1066 = vmatpush1.bf16.msra.mxu0 0
    %1067 = vmatprep.subr.bf16.mxu0 0
    %1068 = vmatpush1.bf16.msra.mxu0 0
    %1069 = vmatprep.subr.bf16.mxu0 0
    %1070 = vmatpush1.bf16.msra.mxu0 0
    %1071 = vmatprep.subr.bf16.mxu0 0
    %1072 = vmatpush1.bf16.msra.mxu0 0
    %1073 = vmatprep.subr.bf16.mxu0 0
    %1074 = vmatpush1.bf16.msra.mxu0 0
    %1075 = vmatprep.subr.bf16.mxu0 0
    %1076 = vmatpush1.bf16.msra.mxu0 0
    %1077 = vmatprep.subr.bf16.mxu0 0
    %1078 = vmatpush1.bf16.msra.mxu0 0
    %1079 = vmatprep.subr.bf16.mxu0 0
    %1080 = vmatpush1.bf16.msra.mxu0 0
    %1081 = vmatprep.mubr.bf16.mxu0 0
    %1082 = vmatmul.mubr.bf16.gmra.mrb[0].mxu0 %v1044
    %v1083 = vpop.f32.mrb[0].mxu0
    %v1084 = vadd.f32 0.0, %v1083
    %v1085 = vpop.f32.mrb[0].mxu0
    %v1086 = vpop.f32.mrb[0].mxu0
    %v1087 = vpop.f32.mrb[0].mxu0
    %1088 = vdwg.mxu0
    %1089 = vrot.lane.b32.xlu0 %v469, 112
    %v1090 = vpop.permute.xlu0 %1089
    %v1092 = vsel %vm470, %v1040, 0
    %v1095 = vsel %vm588, %v1090, 0
    %1097 = vmatprep.subr.bf16.mxu0 0
    %1098 = vmatpush1.bf16.msra.mxu0 %v1095
    %1099 = vmatprep.subr.bf16.mxu0 0
    %1100 = vmatpush1.bf16.msra.mxu0 0
    %1101 = vmatprep.subr.bf16.mxu0 0
    %1102 = vmatpush1.bf16.msra.mxu0 0
    %1103 = vmatprep.subr.bf16.mxu0 0
    %1104 = vmatpush1.bf16.msra.mxu0 0
    %1105 = vmatprep.subr.bf16.mxu0 0
    %1106 = vmatpush1.bf16.msra.mxu0 0
    %1107 = vmatprep.subr.bf16.mxu0 0
    %1108 = vmatpush1.bf16.msra.mxu0 0
    %1109 = vmatprep.subr.bf16.mxu0 0
    %1110 = vmatpush1.bf16.msra.mxu0 0
    %1111 = vmatprep.subr.bf16.mxu0 0
    %1112 = vmatpush1.bf16.msra.mxu0 0
    %1113 = vmatprep.subr.bf16.mxu0 0
    %1114 = vmatpush1.bf16.msra.mxu0 0
    %1115 = vmatprep.subr.bf16.mxu0 0
    %1116 = vmatpush1.bf16.msra.mxu0 0
    %1117 = vmatprep.subr.bf16.mxu0 0
    %1118 = vmatpush1.bf16.msra.mxu0 0
    %1119 = vmatprep.subr.bf16.mxu0 0
    %1120 = vmatpush1.bf16.msra.mxu0 0
    %1121 = vmatprep.subr.bf16.mxu0 0
    %1122 = vmatpush1.bf16.msra.mxu0 0
    %1123 = vmatprep.subr.bf16.mxu0 0
    %1124 = vmatpush1.bf16.msra.mxu0 0
    %1125 = vmatprep.subr.bf16.mxu0 0
    %1126 = vmatpush1.bf16.msra.mxu0 0
    %1127 = vmatprep.subr.bf16.mxu0 0
    %1128 = vmatpush1.bf16.msra.mxu0 0
    %1129 = vmatprep.mubr.bf16.mxu0 0
    %1130 = vmatmul.mubr.bf16.gmra.mrb[0].mxu0 %v1092
    %v1131 = vpop.f32.mrb[0].mxu0
    %v1132 = vadd.f32 0.0, %v1131
    %v1133 = vpop.f32.mrb[0].mxu0
    %v1134 = vpop.f32.mrb[0].mxu0
    %v1135 = vpop.f32.mrb[0].mxu0
    %1136 = vdwg.mxu0
    %v1137 = vmul.f32 %v1084, %v1037
    %v1138 = vmul.f32 %v1132, %v1038
    %1141 = vrot.lane.b32.xlu0 %v1137, 16
    %v1142 = vpop.permute.xlu0 %1141
    %1143 = vrot.lane.b32.xlu0 %v1138, 16
    %v1144 = vpop.permute.xlu0 %1143
    %vm1147 = vcmask 195712
    %1148 = vst.msk [vmem:[#allocation2] sm:$0xff] %vm1147, %v1142
    %1149 = vst.msk [vmem:[#allocation2 + $0x8] sm:$0xff] %vm1147, %v1144
    %1150 = vrot.lane.b32.xlu0 %v464, 104
    %v1151 = vpop.permute.xlu0 %1150
    %1152 = vrot.lane.b32.xlu0 %v466, 104
    %v1153 = vpop.permute.xlu0 %1152
    %v1155 = vsel %vm470, %v1151, 0
    %v1158 = vsel %vm470, %v1153, 0
    %1160 = vmatprep.subr.bf16.mxu0 0
    %1161 = vmatpush1.bf16.xpose.msra.mxu0 %v1158
    %1162 = vmatprep.subr.bf16.mxu0 0
    %1163 = vmatpush1.bf16.xpose.msra.mxu0 0
    %1164 = vmatprep.subr.bf16.mxu0 0
    %1165 = vmatpush1.bf16.xpose.msra.mxu0 0
    %1166 = vmatprep.subr.bf16.mxu0 0
    %1167 = vmatpush1.bf16.xpose.msra.mxu0 0
    %1168 = vmatprep.subr.bf16.mxu0 0
    %1169 = vmatpush1.bf16.xpose.msra.mxu0 0
    %1170 = vmatprep.subr.bf16.mxu0 0
    %1171 = vmatpush1.bf16.xpose.msra.mxu0 0
    %1172 = vmatprep.subr.bf16.mxu0 0
    %1173 = vmatpush1.bf16.xpose.msra.mxu0 0
    %1174 = vmatprep.subr.bf16.mxu0 0
    %1175 = vmatpush1.bf16.xpose.msra.mxu0 0
    %1176 = vmatprep.subr.bf16.mxu0 0
    %1177 = vmatpush1.bf16.xpose.msra.mxu0 0
    %1178 = vmatprep.subr.bf16.mxu0 0
    %1179 = vmatpush1.bf16.xpose.msra.mxu0 0
    %1180 = vmatprep.subr.bf16.mxu0 0
    %1181 = vmatpush1.bf16.xpose.msra.mxu0 0
    %1182 = vmatprep.subr.bf16.mxu0 0
    %1183 = vmatpush1.bf16.xpose.msra.mxu0 0
    %1184 = vmatprep.subr.bf16.mxu0 0
    %1185 = vmatpush1.bf16.xpose.msra.mxu0 0
    %1186 = vmatprep.subr.bf16.mxu0 0
    %1187 = vmatpush1.bf16.xpose.msra.mxu0 0
    %1188 = vmatprep.subr.bf16.mxu0 0
    %1189 = vmatpush1.bf16.xpose.msra.mxu0 0
    %1190 = vmatprep.subr.bf16.mxu0 0
    %1191 = vmatpush1.bf16.xpose.msra.mxu0 0
    %1192 = vmatprep.mubr.bf16.mxu0 0
    %1193 = vmatmul.mubr.bf16.gmra.mrb[0].mxu0 %v1155
    %v1194 = vpop.f32.mrb[0].mxu0
    %v1195 = vadd.f32 0.0, %v1194
    %v1196 = vpop.f32.mrb[0].mxu0
    %v1197 = vpop.f32.mrb[0].mxu0
    %v1198 = vpop.f32.mrb[0].mxu0
    %1199 = vdwg.mxu0
    %1200 = vrot.lane.b32.xlu0 %v465, 104
    %v1201 = vpop.permute.xlu0 %1200
    %1202 = vrot.lane.b32.xlu0 %v467, 104
    %v1203 = vpop.permute.xlu0 %1202
    %v1205 = vsel %vm470, %v1201, 0
    %v1208 = vsel %vm470, %v1203, 0
    %1210 = vmatprep.subr.bf16.mxu0 0
    %1211 = vmatpush1.bf16.xpose.msra.mxu0 %v1208
    %1212 = vmatprep.subr.bf16.mxu0 0
    %1213 = vmatpush1.bf16.xpose.msra.mxu0 0
    %1214 = vmatprep.subr.bf16.mxu0 0
    %1215 = vmatpush1.bf16.xpose.msra.mxu0 0
    %1216 = vmatprep.subr.bf16.mxu0 0
    %1217 = vmatpush1.bf16.xpose.msra.mxu0 0
    %1218 = vmatprep.subr.bf16.mxu0 0
    %1219 = vmatpush1.bf16.xpose.msra.mxu0 0
    %1220 = vmatprep.subr.bf16.mxu0 0
    %1221 = vmatpush1.bf16.xpose.msra.mxu0 0
    %1222 = vmatprep.subr.bf16.mxu0 0
    %1223 = vmatpush1.bf16.xpose.msra.mxu0 0
    %1224 = vmatprep.subr.bf16.mxu0 0
    %1225 = vmatpush1.bf16.xpose.msra.mxu0 0
    %1226 = vmatprep.subr.bf16.mxu0 0
    %1227 = vmatpush1.bf16.xpose.msra.mxu0 0
    %1228 = vmatprep.subr.bf16.mxu0 0
    %1229 = vmatpush1.bf16.xpose.msra.mxu0 0
    %1230 = vmatprep.subr.bf16.mxu0 0
    %1231 = vmatpush1.bf16.xpose.msra.mxu0 0
    %1232 = vmatprep.subr.bf16.mxu0 0
    %1233 = vmatpush1.bf16.xpose.msra.mxu0 0
    %1234 = vmatprep.subr.bf16.mxu0 0
    %1235 = vmatpush1.bf16.xpose.msra.mxu0 0
    %1236 = vmatprep.subr.bf16.mxu0 0
    %1237 = vmatpush1.bf16.xpose.msra.mxu0 0
    %1238 = vmatprep.subr.bf16.mxu0 0
    %1239 = vmatpush1.bf16.xpose.msra.mxu0 0
    %1240 = vmatprep.subr.bf16.mxu0 0
    %1241 = vmatpush1.bf16.xpose.msra.mxu0 0
    %1242 = vmatprep.mubr.bf16.mxu0 0
    %1243 = vmatmul.mubr.bf16.gmra.mrb[0].mxu0 %v1205
    %v1244 = vpop.f32.mrb[0].mxu0
    %v1245 = vadd.f32 0.0, %v1244
    %v1246 = vpop.f32.mrb[0].mxu0
    %v1247 = vpop.f32.mrb[0].mxu0
    %v1248 = vpop.f32.mrb[0].mxu0
    %1249 = vdwg.mxu0
    %v1250 = vsel %vm470, %v1195, -inf
    %1251 = vmax.xlane.f32.xlu0 %v1250
    %v1252 = vpop.xlane.xlu0 %1251
    %v1253 = vsel %vm470, %v1245, -inf
    %1254 = vmax.xlane.f32.xlu0 %v1253
    %v1255 = vpop.xlane.xlu0 %1254
    %v1256 = vsub.f32 %v1195, %v1252
    %v1257 = vsub.f32 %v1245, %v1255
    %v1258 = vmul.f32 %v1256, 1.442695
    %v1259 = vpow.pop %v1258
    %v1260 = vmul.f32 %v1257, 1.442695
    %v1261 = vpow.pop %v1260
    %v1262 = vsel %vm470, %v1259, 0.0
    %1263 = vadd.xlane.f32.xlu0 %v1262
    %v1264 = vpop.xlane.xlu0 %1263
    %v1265 = vsel %vm470, %v1261, 0.0
    %1266 = vadd.xlane.f32.xlu0 %v1265
    %v1267 = vpop.xlane.xlu0 %1266
    %v1268 = vrcp.pop %v1264
    %v1269 = vrcp.pop %v1267
    %v1270 = vpack.c.bf16 %v1259, %v1259
    %v1271 = vpack.c.bf16 %v1261, %v1261
    %1272 = vrot.lane.b32.xlu0 %v468, 104
    %v1273 = vpop.permute.xlu0 %1272
    %v1275 = vsel %vm470, %v1270, 0
    %v1278 = vsel %vm588, %v1273, 0
    %1280 = vmatprep.subr.bf16.mxu0 0
    %1281 = vmatpush1.bf16.msra.mxu0 %v1278
    %1282 = vmatprep.subr.bf16.mxu0 0
    %1283 = vmatpush1.bf16.msra.mxu0 0
    %1284 = vmatprep.subr.bf16.mxu0 0
    %1285 = vmatpush1.bf16.msra.mxu0 0
    %1286 = vmatprep.subr.bf16.mxu0 0
    %1287 = vmatpush1.bf16.msra.mxu0 0
    %1288 = vmatprep.subr.bf16.mxu0 0
    %1289 = vmatpush1.bf16.msra.mxu0 0
    %1290 = vmatprep.subr.bf16.mxu0 0
    %1291 = vmatpush1.bf16.msra.mxu0 0
    %1292 = vmatprep.subr.bf16.mxu0 0
    %1293 = vmatpush1.bf16.msra.mxu0 0
    %1294 = vmatprep.subr.bf16.mxu0 0
    %1295 = vmatpush1.bf16.msra.mxu0 0
    %1296 = vmatprep.subr.bf16.mxu0 0
    %1297 = vmatpush1.bf16.msra.mxu0 0
    %1298 = vmatprep.subr.bf16.mxu0 0
    %1299 = vmatpush1.bf16.msra.mxu0 0
    %1300 = vmatprep.subr.bf16.mxu0 0
    %1301 = vmatpush1.bf16.msra.mxu0 0
    %1302 = vmatprep.subr.bf16.mxu0 0
    %1303 = vmatpush1.bf16.msra.mxu0 0
    %1304 = vmatprep.subr.bf16.mxu0 0
    %1305 = vmatpush1.bf16.msra.mxu0 0
    %1306 = vmatprep.subr.bf16.mxu0 0
    %1307 = vmatpush1.bf16.msra.mxu0 0
    %1308 = vmatprep.subr.bf16.mxu0 0
    %1309 = vmatpush1.bf16.msra.mxu0 0
    %1310 = vmatprep.subr.bf16.mxu0 0
    %1311 = vmatpush1.bf16.msra.mxu0 0
    %1312 = vmatprep.mubr.bf16.mxu0 0
    %1313 = vmatmul.mubr.bf16.gmra.mrb[0].mxu0 %v1275
    %v1314 = vpop.f32.mrb[0].mxu0
    %v1315 = vadd.f32 0.0, %v1314
    %v1316 = vpop.f32.mrb[0].mxu0
    %v1317 = vpop.f32.mrb[0].mxu0
    %v1318 = vpop.f32.mrb[0].mxu0
    %1319 = vdwg.mxu0
    %1320 = vrot.lane.b32.xlu0 %v469, 104
    %v1321 = vpop.permute.xlu0 %1320
    %v1323 = vsel %vm470, %v1271, 0
    %v1326 = vsel %vm588, %v1321, 0
    %1328 = vmatprep.subr.bf16.mxu0 0
    %1329 = vmatpush1.bf16.msra.mxu0 %v1326
    %1330 = vmatprep.subr.bf16.mxu0 0
    %1331 = vmatpush1.bf16.msra.mxu0 0
    %1332 = vmatprep.subr.bf16.mxu0 0
    %1333 = vmatpush1.bf16.msra.mxu0 0
    %1334 = vmatprep.subr.bf16.mxu0 0
    %1335 = vmatpush1.bf16.msra.mxu0 0
    %1336 = vmatprep.subr.bf16.mxu0 0
    %1337 = vmatpush1.bf16.msra.mxu0 0
    %1338 = vmatprep.subr.bf16.mxu0 0
    %1339 = vmatpush1.bf16.msra.mxu0 0
    %1340 = vmatprep.subr.bf16.mxu0 0
    %1341 = vmatpush1.bf16.msra.mxu0 0
    %1342 = vmatprep.subr.bf16.mxu0 0
    %1343 = vmatpush1.bf16.msra.mxu0 0
    %1344 = vmatprep.subr.bf16.mxu0 0
    %1345 = vmatpush1.bf16.msra.mxu0 0
    %1346 = vmatprep.subr.bf16.mxu0 0
    %1347 = vmatpush1.bf16.msra.mxu0 0
    %1348 = vmatprep.subr.bf16.mxu0 0
    %1349 = vmatpush1.bf16.msra.mxu0 0
    %1350 = vmatprep.subr.bf16.mxu0 0
    %1351 = vmatpush1.bf16.msra.mxu0 0
    %1352 = vmatprep.subr.bf16.mxu0 0
    %1353 = vmatpush1.bf16.msra.mxu0 0
    %1354 = vmatprep.subr.bf16.mxu0 0
    %1355 = vmatpush1.bf16.msra.mxu0 0
    %1356 = vmatprep.subr.bf16.mxu0 0
    %1357 = vmatpush1.bf16.msra.mxu0 0
    %1358 = vmatprep.subr.bf16.mxu0 0
    %1359 = vmatpush1.bf16.msra.mxu0 0
    %1360 = vmatprep.mubr.bf16.mxu0 0
    %1361 = vmatmul.mubr.bf16.gmra.mrb[0].mxu0 %v1323
    %v1362 = vpop.f32.mrb[0].mxu0
    %v1363 = vadd.f32 0.0, %v1362
    %v1364 = vpop.f32.mrb[0].mxu0
    %v1365 = vpop.f32.mrb[0].mxu0
    %v1366 = vpop.f32.mrb[0].mxu0
    %1367 = vdwg.mxu0
    %v1368 = vmul.f32 %v1315, %v1268
    %v1369 = vmul.f32 %v1363, %v1269
    %1372 = vrot.lane.b32.xlu0 %v1368, 24
    %v1373 = vpop.permute.xlu0 %1372
    %1374 = vrot.lane.b32.xlu0 %v1369, 24
    %v1375 = vpop.permute.xlu0 %1374
    %vm1378 = vcmask 261312
    %1379 = vst.msk [vmem:[#allocation2] sm:$0xff] %vm1378, %v1373
    %1380 = vst.msk [vmem:[#allocation2 + $0x8] sm:$0xff] %vm1378, %v1375
    %v1381 = vld [vmem:[#allocation2] sm:$0xff]
    %v1382 = vld [vmem:[#allocation2 + $0x8] sm:$0xff]
    %v1383 = vpack.c.bf16 %v1382, %v1381
    %v1384 = vld [vmem:[%s9] sm:$0xf]
    %v1385 = vld [vmem:[%s9 + $0x4] sm:$0xf]
    %v1386 = vld [vmem:[%s9 + $0x8] sm:$0xf]
    %v1387 = vld [vmem:[%s9 + $0xc] sm:$0xf]
    %v1388 = vld [vmem:[#allocation12] sm:$0x1]
    %v1390 = vlaneseq
    %v1391 = vshrl.u32 %v1390, 7
    %v1392 = vsub.s32 0, %v1391
    %v1393 = vrot.slane %v1388, %v1392
    %v1399 = vunpack.c.l.b16 %v1384
    %v1400 = vunpack.c.l.b16 %v1385
    %v1401 = vunpack.c.l.b16 %v1386
    %v1402 = vunpack.c.l.b16 %v1387
    %v1403 = vpack.c.b16 %v1400, %v1399
    %v1404 = vpack.c.b16 %v1402, %v1401
    %v1408 = vsel %vm222, %v1383, 0
    %1410 = vmatprep.subr.bf16.mxu0 0
    %1411 = vmatpush1.bf16.msra.mxu0 %v1403
    %1412 = vmatprep.subr.bf16.mxu0 0
    %1413 = vmatpush1.bf16.msra.mxu0 %v1404
    %1414 = vmatprep.subr.bf16.mxu0 0
    %1415 = vmatpush1.bf16.msra.mxu0 0
    %1416 = vmatprep.subr.bf16.mxu0 0
    %1417 = vmatpush1.bf16.msra.mxu0 0
    %1418 = vmatprep.subr.bf16.mxu0 0
    %1419 = vmatpush1.bf16.msra.mxu0 0
    %1420 = vmatprep.subr.bf16.mxu0 0
    %1421 = vmatpush1.bf16.msra.mxu0 0
    %1422 = vmatprep.subr.bf16.mxu0 0
    %1423 = vmatpush1.bf16.msra.mxu0 0
    %1424 = vmatprep.subr.bf16.mxu0 0
    %1425 = vmatpush1.bf16.msra.mxu0 0
    %1426 = vmatprep.subr.bf16.mxu0 0
    %1427 = vmatpush1.bf16.msra.mxu0 0
    %1428 = vmatprep.subr.bf16.mxu0 0
    %1429 = vmatpush1.bf16.msra.mxu0 0
    %1430 = vmatprep.subr.bf16.mxu0 0
    %1431 = vmatpush1.bf16.msra.mxu0 0
    %1432 = vmatprep.subr.bf16.mxu0 0
    %1433 = vmatpush1.bf16.msra.mxu0 0
    %1434 = vmatprep.subr.bf16.mxu0 0
    %1435 = vmatpush1.bf16.msra.mxu0 0
    %1436 = vmatprep.subr.bf16.mxu0 0
    %1437 = vmatpush1.bf16.msra.mxu0 0
    %1438 = vmatprep.subr.bf16.mxu0 0
    %1439 = vmatpush1.bf16.msra.mxu0 0
    %1440 = vmatprep.subr.bf16.mxu0 0
    %1441 = vmatpush1.bf16.msra.mxu0 0
    %1442 = vmatprep.mubr.bf16.mxu0 0
    %1443 = vmatmul.mubr.bf16.gmra.mrb[0].mxu0 %v1408
    %v1444 = vpop.f32.mrb[0].mxu0
    %v1445 = vadd.f32 %v1393, %v1444
    %v1446 = vpop.f32.mrb[0].mxu0
    %v1447 = vpop.f32.mrb[0].mxu0
    %v1448 = vadd.f32 %v1393, %v1447
    %v1449 = vpop.f32.mrb[0].mxu0
    %1450 = vdwg.mxu0
    %v1451 = vadd.f32 %v197, %v1445
    %v1452 = vadd.f32 %v220, %v1448
    %v1453 = vsel %vm222, %v1451, 0.0
    %1454 = vadd.xlane.f32.xlu0 %v1453
    %v1455 = vpop.xlane.xlu0 %1454
    %v1456 = vsel %vm222, %v1452, 0.0
    %1457 = vadd.xlane.f32.xlu0 %v1456
    %v1458 = vpop.xlane.xlu0 %1457
    %v1459 = vmul.f32 %v1455, %v229
    %v1460 = vmul.f32 %v1458, %v229
    %v1461 = vsub.f32 %v1451, %v1459
    %v1462 = vsub.f32 %v1452, %v1460
    %v1463 = vmul.f32 %v1461, %v1461
    %v1464 = vmul.f32 %v1462, %v1462
    %v1465 = vsel %vm222, %v1463, 0.0
    %1466 = vadd.xlane.f32.xlu0 %v1465
    %v1467 = vpop.xlane.xlu0 %1466
    %v1468 = vsel %vm222, %v1464, 0.0
    %1469 = vadd.xlane.f32.xlu0 %v1468
    %v1470 = vpop.xlane.xlu0 %1469
    %v1471 = vmul.f32 %v1467, %v229
    %v1472 = vmul.f32 %v1470, %v229
    %v1473 = vadd.f32 %v1471, 1e-05
    %v1474 = vadd.f32 %v1472, 1e-05
    %v1475 = vrsqrt.pop %v1473
    %v1476 = vrsqrt.pop %v1474
    %v1477 = vmul.f32 %v1461, %v1475
    %v1478 = vmul.f32 %v1462, %v1476
    %v1479 = vld [vmem:[#allocation14] sm:$0x1]
    %v1481 = vlaneseq
    %v1482 = vshrl.u32 %v1481, 7
    %v1483 = vsub.s32 0, %v1482
    %v1484 = vrot.slane %v1479, %v1483
    %v1486 = vmul.f32 %v1477, %v1484
    %v1487 = vmul.f32 %v1478, %v1484
    %v1488 = vld [vmem:[#allocation15] sm:$0x1]
    %v1490 = vlaneseq
    %v1491 = vshrl.u32 %v1490, 7
    %v1492 = vsub.s32 0, %v1491
    %v1493 = vrot.slane %v1488, %v1492
    %v1495 = vadd.f32 %v1486, %v1493
    %v1496 = vadd.f32 %v1487, %v1493
    %v1497 = vpack.c.bf16 %v1496, %v1495
    %v1498 = vld [vmem:[%s13] sm:$0xf]
    %v1499 = vld [vmem:[%s13 + $0x4] sm:$0xf]
    %v1500 = vld [vmem:[%s13 + $0x8] sm:$0xf]
    %v1501 = vld [vmem:[%s13 + $0xc] sm:$0xf]
    %v1502 = vld [vmem:[%s14] sm:$0x1]
    %v1504 = vlaneseq
    %v1505 = vshrl.u32 %v1504, 7
    %v1506 = vsub.s32 0, %v1505
    %v1507 = vrot.slane %v1502, %v1506
    %v1513 = vunpack.c.l.b16 %v1498
    %v1514 = vunpack.c.l.b16 %v1499
    %v1515 = vunpack.c.l.b16 %v1500
    %v1516 = vunpack.c.l.b16 %v1501
    %v1517 = vpack.c.b16 %v1514, %v1513
    %v1518 = vpack.c.b16 %v1516, %v1515
    %v1522 = vsel %vm222, %v1497, 0
    %1524 = vmatprep.subr.bf16.mxu0 0
    %1525 = vmatpush1.bf16.msra.mxu0 %v1517
    %1526 = vmatprep.subr.bf16.mxu0 0
    %1527 = vmatpush1.bf16.msra.mxu0 %v1518
    %1528 = vmatprep.subr.bf16.mxu0 0
    %1529 = vmatpush1.bf16.msra.mxu0 0
    %1530 = vmatprep.subr.bf16.mxu0 0
    %1531 = vmatpush1.bf16.msra.mxu0 0
    %1532 = vmatprep.subr.bf16.mxu0 0
    %1533 = vmatpush1.bf16.msra.mxu0 0
    %1534 = vmatprep.subr.bf16.mxu0 0
    %1535 = vmatpush1.bf16.msra.mxu0 0
    %1536 = vmatprep.subr.bf16.mxu0 0
    %1537 = vmatpush1.bf16.msra.mxu0 0
    %1538 = vmatprep.subr.bf16.mxu0 0
    %1539 = vmatpush1.bf16.msra.mxu0 0
    %1540 = vmatprep.subr.bf16.mxu0 0
    %1541 = vmatpush1.bf16.msra.mxu0 0
    %1542 = vmatprep.subr.bf16.mxu0 0
    %1543 = vmatpush1.bf16.msra.mxu0 0
    %1544 = vmatprep.subr.bf16.mxu0 0
    %1545 = vmatpush1.bf16.msra.mxu0 0
    %1546 = vmatprep.subr.bf16.mxu0 0
    %1547 = vmatpush1.bf16.msra.mxu0 0
    %1548 = vmatprep.subr.bf16.mxu0 0
    %1549 = vmatpush1.bf16.msra.mxu0 0
    %1550 = vmatprep.subr.bf16.mxu0 0
    %1551 = vmatpush1.bf16.msra.mxu0 0
    %1552 = vmatprep.subr.bf16.mxu0 0
    %1553 = vmatpush1.bf16.msra.mxu0 0
    %1554 = vmatprep.subr.bf16.mxu0 0
    %1555 = vmatpush1.bf16.msra.mxu0 0
    %1556 = vmatprep.mubr.bf16.mxu0 0
    %1557 = vmatmul.mubr.bf16.gmra.mrb[0].mxu0 %v1522
    %v1558 = vpop.f32.mrb[0].mxu0
    %v1559 = vadd.f32 %v1507, %v1558
    %v1560 = vpop.f32.mrb[0].mxu0
    %v1561 = vpop.f32.mrb[0].mxu0
    %v1562 = vadd.f32 %v1507, %v1561
    %v1563 = vpop.f32.mrb[0].mxu0
    %1564 = vdwg.mxu0
    %v1565 = vmul.f32 %v1559, 0.5
    %v1566 = vmul.f32 %v1562, 0.5
    %v1567 = vmul.f32 %v1559, 0.70710677
    %v1568 = vmul.f32 %v1562, 0.70710677
    %v1569 = verf.f32.pop %v1567
    %v1570 = verf.f32.pop %v1568
    %v1571 = vadd.f32 %v1569, 1.0
    %v1572 = vadd.f32 %v1570, 1.0
    %v1573 = vmul.f32 %v1565, %v1571
    %v1574 = vmul.f32 %v1566, %v1572
    %v1575 = vpack.c.bf16 %v1574, %v1573
    %v1576 = vld [vmem:[%s15] sm:$0xf]
    %v1577 = vld [vmem:[%s15 + $0x4] sm:$0xf]
    %v1578 = vld [vmem:[%s15 + $0x8] sm:$0xf]
    %v1579 = vld [vmem:[%s15 + $0xc] sm:$0xf]
    %v1580 = vld [vmem:[%s15 + $0x10] sm:$0xf]
    %v1581 = vld [vmem:[%s15 + $0x14] sm:$0xf]
    %v1582 = vld [vmem:[%s15 + $0x18] sm:$0xf]
    %v1583 = vld [vmem:[%s15 + $0x1c] sm:$0xf]
    %v1584 = vld [vmem:[%s16] sm:$0x1]
    %v1586 = vlaneseq
    %v1587 = vshrl.u32 %v1586, 7
    %v1588 = vsub.s32 0, %v1587
    %v1589 = vrot.slane %v1584, %v1588
    %v1599 = vunpack.c.l.b16 %v1576
    %v1600 = vunpack.c.l.b16 %v1577
    %v1601 = vunpack.c.l.b16 %v1578
    %v1602 = vunpack.c.l.b16 %v1579
    %v1603 = vunpack.c.l.b16 %v1580
    %v1604 = vunpack.c.l.b16 %v1581
    %v1605 = vunpack.c.l.b16 %v1582
    %v1606 = vunpack.c.l.b16 %v1583
    %v1607 = vpack.c.b16 %v1600, %v1599
    %v1608 = vpack.c.b16 %v1602, %v1601
    %v1609 = vpack.c.b16 %v1604, %v1603
    %v1610 = vpack.c.b16 %v1606, %v1605
    %vm1615 = vcmask 523264
    %v1617 = vsel %vm1615, %v1575, 0
    %1619 = vmatprep.subr.bf16.mxu0 0
    %1620 = vmatpush1.bf16.msra.mxu0 %v1607
    %1621 = vmatprep.subr.bf16.mxu0 0
    %1622 = vmatpush1.bf16.msra.mxu0 %v1608
    %1623 = vmatprep.subr.bf16.mxu0 0
    %1624 = vmatpush1.bf16.msra.mxu0 %v1609
    %1625 = vmatprep.subr.bf16.mxu0 0
    %1626 = vmatpush1.bf16.msra.mxu0 %v1610
    %1627 = vmatprep.subr.bf16.mxu0 0
    %1628 = vmatpush1.bf16.msra.mxu0 0
    %1629 = vmatprep.subr.bf16.mxu0 0
    %1630 = vmatpush1.bf16.msra.mxu0 0
    %1631 = vmatprep.subr.bf16.mxu0 0
    %1632 = vmatpush1.bf16.msra.mxu0 0
    %1633 = vmatprep.subr.bf16.mxu0 0
    %1634 = vmatpush1.bf16.msra.mxu0 0
    %1635 = vmatprep.subr.bf16.mxu0 0
    %1636 = vmatpush1.bf16.msra.mxu0 0
    %1637 = vmatprep.subr.bf16.mxu0 0
    %1638 = vmatpush1.bf16.msra.mxu0 0
    %1639 = vmatprep.subr.bf16.mxu0 0
    %1640 = vmatpush1.bf16.msra.mxu0 0
    %1641 = vmatprep.subr.bf16.mxu0 0
    %1642 = vmatpush1.bf16.msra.mxu0 0
    %1643 = vmatprep.subr.bf16.mxu0 0
    %1644 = vmatpush1.bf16.msra.mxu0 0
    %1645 = vmatprep.subr.bf16.mxu0 0
    %1646 = vmatpush1.bf16.msra.mxu0 0
    %1647 = vmatprep.subr.bf16.mxu0 0
    %1648 = vmatpush1.bf16.msra.mxu0 0
    %1649 = vmatprep.subr.bf16.mxu0 0
    %1650 = vmatpush1.bf16.msra.mxu0 0
    %1651 = vmatprep.mubr.bf16.mxu0 0
    %1652 = vmatmul.mubr.bf16.gmra.mrb[0].mxu0 %v1617
    %v1653 = vpop.f32.mrb[0].mxu0
    %v1654 = vadd.f32 %v1589, %v1653
    %v1655 = vpop.f32.mrb[0].mxu0
    %v1656 = vpop.f32.mrb[0].mxu0
    %v1657 = vadd.f32 %v1589, %v1656
    %v1658 = vpop.f32.mrb[0].mxu0
    %1659 = vdwg.mxu0
    %v1660 = vadd.f32 %v1451, %v1654
    %v1661 = vadd.f32 %v1452, %v1657
    %v1663 = vcombine.high %v1660, %v1660
    %v1665 = vunpack.c.l.s4 1966171168
    %v1666 = vunpack.c.0.s8 %v1665
    %v1667 = vlaneseq
    %v1668 = vshrl.u32 %v1667, 7
    %v1669 = vsub.s32 %v1666, %v1668
    %v1670 = vrot.slane %v1660, %v1669
    %v1672 = vunpack.c.l.s4 1966171168
    %v1673 = vunpack.c.0.s8 %v1672
    %v1674 = vlaneseq
    %v1675 = vshrl.u32 %v1674, 7
    %v1676 = vsub.s32 %v1673, %v1675
    %v1677 = vrot.slane %v1663, %v1676
    %v1678 = vcombine.high %v1670, %v1670
    %v1679 = vcombine.high %v1677, %v1677
    %v1681 = vunpack.c.l.s4 1966171168
    %v1682 = vunpack.c.0.s8 %v1681
    %v1683 = vlaneseq
    %v1684 = vshrl.u32 %v1683, 7
    %v1685 = vsub.s32 %v1682, %v1684
    %v1686 = vrot.slane %v1670, %v1685
    %v1688 = vunpack.c.l.s4 1966171168
    %v1689 = vunpack.c.0.s8 %v1688
    %v1690 = vlaneseq
    %v1691 = vshrl.u32 %v1690, 7
    %v1692 = vsub.s32 %v1689, %v1691
    %v1693 = vrot.slane %v1677, %v1692
    %v1695 = vunpack.c.l.s4 1966171168
    %v1696 = vunpack.c.0.s8 %v1695
    %v1697 = vlaneseq
    %v1698 = vshrl.u32 %v1697, 7
    %v1699 = vsub.s32 %v1696, %v1698
    %v1700 = vrot.slane %v1678, %v1699
    %v1702 = vunpack.c.l.s4 1966171168
    %v1703 = vunpack.c.0.s8 %v1702
    %v1704 = vlaneseq
    %v1705 = vshrl.u32 %v1704, 7
    %v1706 = vsub.s32 %v1703, %v1705
    %v1707 = vrot.slane %v1679, %v1706
    %v1708 = vcombine.high %v1686, %v1686
    %v1709 = vcombine.high %v1693, %v1693
    %v1710 = vcombine.high %v1700, %v1700
    %v1711 = vcombine.high %v1707, %v1707
    %vm1720 = vcmask 253952
    %1721 = vst.msk [vmem:[#allocation17] sm:$0x1] %vm1720, %v1686
    %1722 = vst.msk [vmem:[#allocation17 + $0x2] sm:$0x1] %vm1720, %v1700
    %1723 = vst.msk [vmem:[#allocation17 + $0x4] sm:$0x1] %vm1720, %v1708
    %1724 = vst.msk [vmem:[#allocation17 + $0x6] sm:$0x1] %vm1720, %v1710
    %1725 = vst.msk [vmem:[#allocation17 + $0x8] sm:$0x1] %vm1720, %v1693
    %1726 = vst.msk [vmem:[#allocation17 + $0xa] sm:$0x1] %vm1720, %v1707
    %1727 = vst.msk [vmem:[#allocation17 + $0xc] sm:$0x1] %vm1720, %v1709
    %1728 = vst.msk [vmem:[#allocation17 + $0xe] sm:$0x1] %vm1720, %v1711
    %v1730 = vcombine.high %v1661, %v1661
    %v1732 = vunpack.c.l.s4 1966171168
    %v1733 = vunpack.c.0.s8 %v1732
    %v1734 = vlaneseq
    %v1735 = vshrl.u32 %v1734, 7
    %v1736 = vsub.s32 %v1733, %v1735
    %v1737 = vrot.slane %v1661, %v1736
    %v1739 = vunpack.c.l.s4 1966171168
    %v1740 = vunpack.c.0.s8 %v1739
    %v1741 = vlaneseq
    %v1742 = vshrl.u32 %v1741, 7
    %v1743 = vsub.s32 %v1740, %v1742
    %v1744 = vrot.slane %v1730, %v1743
    %v1745 = vcombine.high %v1737, %v1737
    %v1746 = vcombine.high %v1744, %v1744
    %v1748 = vunpack.c.l.s4 1966171168
    %v1749 = vunpack.c.0.s8 %v1748
    %v1750 = vlaneseq
    %v1751 = vshrl.u32 %v1750, 7
    %v1752 = vsub.s32 %v1749, %v1751
    %v1753 = vrot.slane %v1737, %v1752
    %v1755 = vunpack.c.l.s4 1966171168
    %v1756 = vunpack.c.0.s8 %v1755
    %v1757 = vlaneseq
    %v1758 = vshrl.u32 %v1757, 7
    %v1759 = vsub.s32 %v1756, %v1758
    %v1760 = vrot.slane %v1744, %v1759
    %v1762 = vunpack.c.l.s4 1966171168
    %v1763 = vunpack.c.0.s8 %v1762
    %v1764 = vlaneseq
    %v1765 = vshrl.u32 %v1764, 7
    %v1766 = vsub.s32 %v1763, %v1765
    %v1767 = vrot.slane %v1745, %v1766
    %v1769 = vunpack.c.l.s4 1966171168
    %v1770 = vunpack.c.0.s8 %v1769
    %v1771 = vlaneseq
    %v1772 = vshrl.u32 %v1771, 7
    %v1773 = vsub.s32 %v1770, %v1772
    %v1774 = vrot.slane %v1746, %v1773
    %v1775 = vcombine.high %v1753, %v1753
    %v1776 = vcombine.high %v1760, %v1760
    %v1777 = vcombine.high %v1767, %v1767
    %v1778 = vcombine.high %v1774, %v1774
    %1787 = vst.msk [vmem:[#allocation17 + $0x1] sm:$0x1] %vm1720, %v1753
    %1788 = vst.msk [vmem:[#allocation17 + $0x3] sm:$0x1] %vm1720, %v1767
    %1789 = vst.msk [vmem:[#allocation17 + $0x5] sm:$0x1] %vm1720, %v1775
    %1790 = vst.msk [vmem:[#allocation17 + $0x7] sm:$0x1] %vm1720, %v1777
    %1791 = vst.msk [vmem:[#allocation17 + $0x9] sm:$0x1] %vm1720, %v1760
    %1792 = vst.msk [vmem:[#allocation17 + $0xb] sm:$0x1] %vm1720, %v1774
    %1793 = vst.msk [vmem:[#allocation17 + $0xd] sm:$0x1] %vm1720, %v1776
    %1794 = vst.msk [vmem:[#allocation17 + $0xf] sm:$0x1] %vm1720, %v1778
    // Predicated region
    $region102: #{tpu_custom_call.1} parent=1 // pred_check
      _
    $region103: #{tpu_custom_call.1} parent=1 // pred_check_branch
      %1796 = sbr.rel (0) target = $region105
    $region104: #{tpu_custom_call.1} parent=1 // pred_region
      %s1798 = ssub.s32 256, 256
      %1799 = vsyncadd [#allocation5], %s1798
      %s1800 = sshll.u32 [#allocation17], 4
      %s1801 = int_to_ptr.vmem [resolvable:$true] %s1800
      %1806 = dma.vmem_to_hbm [thread:$0]  %s1801, 256, %s17, [#allocation5], 32, 32, 2
    $region105: #{tpu_custom_call.1} parent=1 // pred_fallthru
      _
    // Predicated region
    $region106: #{tpu_custom_call.1} parent=1 // pred_check
      _
    $region107: #{tpu_custom_call.1} parent=1 // pred_check_branch
      %1808 = sbr.rel (0) target = $region109
    $region108: #{tpu_custom_call.1} parent=1 // pred_region
      %1809 = dma.done [#allocation5], 256
    $region109: #{tpu_custom_call.1} parent=1 // pred_fallthru
      _
    %1810 = vsyncpa [#allocation4], 1
    %1811 = vsyncpa [#allocation7], 1
    %1812 = vsyncpa [#allocation10], 1
    %1813 = vsyncpa [#allocation13], 1
    %1814 = vsyncpa [#allocation16], 1
    %1815 = vsyncpa [#allocation5], 1

</llo_original>
